<compile_context>
chip_gen: v7x
topology: tpu7x:2x2x1
jax: 0.10.0
libtpu: 0.0.40
codegen_flags: <defaults>
</compile_context>

<pallas_src>
import functools

import jax
import jax.numpy as jnp
from jax.experimental import pallas as pl
from jax.experimental.pallas import tpu as pltpu


def _sigmoid(z):
    # sigmoid(z) == 0.5 * (1 + tanh(z/2)); exact, and tanh goes to the EUP.
    return 0.5 * jnp.tanh(0.5 * z) + 0.5


def _lstm_last_linear_kernel(x_ref, w_ih_ref, w_hh_ref, b_ref,
                             w_lin_ref, b_lin_ref, out_ref, gx_ref,
                             *, linear_as_reduce):
    """LSTM recurrence in VMEM followed by the final Linear on h_T.

    x_ref     : (T, B, I)    time-major input
    w_ih_ref  : (I, 4*Hp)    gate order [i, f, g, o], each block padded H->Hp
    w_hh_ref  : (Hp, 4*Hp)   padded rows + gate-padded cols
    b_ref     : (1, 4*Hp)    b_ih + b_hh, gate-padded
    w_lin_ref : (1, Hp)      if linear_as_reduce else (Hp, O)
    b_lin_ref : (1, O)
    out_ref   : (B, O)
    gx_ref    : (T, B, 4*Hp) VMEM scratch for the hoisted input projection
    """
    T, B, I = x_ref.shape
    Hp = w_hh_ref.shape[0]
    H2 = 2 * Hp
    H3 = 3 * Hp
    G4 = 4 * Hp

    w_ih = w_ih_ref[...]          # (I, 4Hp)
    b = b_ref[...]                # (1, 4Hp)
    xs = x_ref[...]               # (T, B, I)

    # ---- hoisted input projection + bias for all T steps (off the serial
    # ---- h->h chain), stashed in VMEM scratch to bound its live range ----
    if I == 1:
        gx_ref[...] = xs * w_ih.reshape(1, 1, G4) + b.reshape(1, 1, G4)
    else:
        for t in range(T):
            gx_ref[t] = (jnp.dot(xs[t], w_ih,
                                 preferred_element_type=jnp.float32) + b)

    w_hh = w_hh_ref[...]          # (Hp, 4Hp), streamed into the MXU per step

    # ---- recurrence: fully unrolled (T is small and static) ----
    h = jnp.zeros((B, Hp), jnp.float32)
    c = jnp.zeros((B, Hp), jnp.float32)
    for t in range(T):
        gates = gx_ref[t] + jnp.dot(h, w_hh,
                                    preferred_element_type=jnp.float32)
        i_f = _sigmoid(gates[:, :H2])          # contiguous [i | f] slab
        g_g = jnp.tanh(gates[:, H2:H3])        # g
        c = i_f[:, Hp:] * c + i_f[:, :Hp] * g_g
        o_g = _sigmoid(gates[:, H3:])          # o, off the c->tanh(c) path
        h = o_g * jnp.tanh(c)

    # predictions = linear(lstm_out[:, -1, :])
    if linear_as_reduce:
        # Hp -> 1 projection as VPU multiply + lane reduction (no MXU tail).
        pred = jnp.sum(h * w_lin_ref[...], axis=-1, keepdims=True)
        pred = pred + b_lin_ref[...]
    else:
        pred = jax.lax.dot_general(h, w_lin_ref[...],
                                   (((1,), (0,)), ((), ())),
                                   preferred_element_type=jnp.float32)
        pred = pred + b_lin_ref[...]
    out_ref[...] = pred.astype(out_ref.dtype)


def pack_stock_lstm_params(params):
    """One-time repack of PyTorch-layout LSTM/Linear weights for the kernel.

    Zero padding H -> Hp is provably inert: padded gate pre-activations are 0,
    so i/f/o_pad = 0.5, g_pad = 0 => c_pad stays 0, h_pad = 0.5*tanh(0) = 0,
    and the padded linear-weight lanes are 0.
    """
    w_ih, w_hh = params["w_ih"], params["w_hh"]       # (4H, I), (4H, H)
    b_ih, b_hh = params["b_ih"], params["b_hh"]       # (4H,), (4H,)
    w_lin, b_lin = params["w_lin"], params["b_lin"]   # (O, H), (O,)
    H = w_hh.shape[1]
    O = w_lin.shape[0]
    Hp = ((H + 127) // 128) * 128                     # lane-aligned hidden size

    def pad_gate_cols(w_t):
        # (X, 4H), PyTorch gate order [i,f,g,o] -> (X, 4Hp), each block padded.
        blocks = [w_t[:, k * H:(k + 1) * H] for k in range(4)]
        return jnp.concatenate(
            [jnp.pad(blk, ((0, 0), (0, Hp - H))) for blk in blocks], axis=1)

    packed = {
        "w_ih": pad_gate_cols(jnp.transpose(w_ih)),                        # (I, 4Hp)
        "w_hh": pad_gate_cols(
            jnp.pad(jnp.transpose(w_hh), ((0, Hp - H), (0, 0)))),          # (Hp, 4Hp)
        "b": pad_gate_cols((b_ih + b_hh).reshape(1, 4 * H)),               # (1, 4Hp)
        "b_lin": b_lin.reshape(1, O),                                      # (1, O)
    }
    if O == 1:
        packed["w_lin"] = jnp.pad(w_lin, ((0, 0), (0, Hp - H)))            # (1, Hp)
    else:
        packed["w_lin"] = jnp.pad(jnp.transpose(w_lin), ((0, Hp - H), (0, 0)))  # (Hp, O)
    packed = jax.tree_util.tree_map(lambda a: jnp.asarray(a, jnp.float32), packed)
    return packed


@jax.jit
def stock_lstm_forward(x, packed):
    """Pallas forward pass matching StockLSTM.forward (batch_first LSTM).

    `packed` must come from pack_stock_lstm_params (call it once, reuse).
    """
    B, T, I = x.shape
    Hp = packed["w_hh"].shape[0]
    O = packed["b_lin"].shape[1]
    linear_as_reduce = packed["w_lin"].shape[0] == 1

    x_tbi = jnp.transpose(x, (1, 0, 2))               # (T, B, I), time-major

    vmem_spec = pl.BlockSpec(memory_space=pltpu.MemorySpace.VMEM)
    kernel = functools.partial(_lstm_last_linear_kernel,
                               linear_as_reduce=linear_as_reduce)
    return pl.pallas_call(
        kernel,
        out_shape=jax.ShapeDtypeStruct((B, O), x.dtype),
        in_specs=[vmem_spec] * 6,
        out_specs=vmem_spec,
        scratch_shapes=[pltpu.VMEM((T, B, 4 * Hp), jnp.float32)],
    )(x_tbi, packed["w_ih"], packed["w_hh"], packed["b"],
      packed["w_lin"], packed["b_lin"])


def stock_lstm_ref(x, params):
    """Pure-JAX reference matching PyTorch nn.LSTM + Linear semantics."""
    w_ih, w_hh = params["w_ih"], params["w_hh"]
    b_ih, b_hh = params["b_ih"], params["b_hh"]
    w_lin, b_lin = params["w_lin"], params["b_lin"]
    B, T, I = x.shape
    H = w_hh.shape[1]

    def step(carry, x_t):
        h, c = carry
        gates = x_t @ w_ih.T + b_ih + h @ w_hh.T + b_hh
        i = jax.nn.sigmoid(gates[:, :H])
        f = jax.nn.sigmoid(gates[:, H:2 * H])
        g = jnp.tanh(gates[:, 2 * H:3 * H])
        o = jax.nn.sigmoid(gates[:, 3 * H:])
        c = f * c + i * g
        h = o * jnp.tanh(c)
        return (h, c), None

    init = (jnp.zeros((B, H), jnp.float32), jnp.zeros((B, H), jnp.float32))
    (h_last, _), _ = jax.lax.scan(step, init, jnp.swapaxes(x, 0, 1))
    return h_last @ w_lin.T + b_lin


if __name__ == "__main__":
    # StockLSTM(input_size=1, hidden_layer_size=100, output_size=1)
    B, T, I, H, O = 2, 8, 1, 100, 1
    key = jax.random.PRNGKey(0)
    keys = jax.random.split(key, 7)
    k = 1.0 / float(H) ** 0.5  # PyTorch uniform(-1/sqrt(H), 1/sqrt(H)) init

    params = {
        "w_ih": jax.random.uniform(keys[0], (4 * H, I), jnp.float32, -k, k),
        "w_hh": jax.random.uniform(keys[1], (4 * H, H), jnp.float32, -k, k),
        "b_ih": jax.random.uniform(keys[2], (4 * H,), jnp.float32, -k, k),
        "b_hh": jax.random.uniform(keys[3], (4 * H,), jnp.float32, -k, k),
        "w_lin": jax.random.uniform(keys[4], (O, H), jnp.float32, -k, k),
        "b_lin": jax.random.uniform(keys[5], (O,), jnp.float32, -k, k),
    }
    x = jax.random.normal(keys[6], (B, T, I), jnp.float32)

    # One-time weight repack (kept on device, reused across forward calls).
    packed = jax.block_until_ready(pack_stock_lstm_params(params))

    out = stock_lstm_forward(x, packed)
    out = jax.block_until_ready(out)

    ref = stock_lstm_ref(x, params)
    assert out.shape == (B, O), out.shape
    assert jnp.allclose(out, ref, atol=1e-5, rtol=1e-5), (out, ref)

    print("KERNEL_OK")
</pallas_src>

<mosaic_0001>
module attributes {stable_mosaic.version = 11 : i64} {
  func.func @_lstm_last_linear_kernel(%arg0: memref<8x2x1xf32, #tpu.memory_space<vmem>>, %arg1: memref<1x512xf32, #tpu.memory_space<vmem>>, %arg2: memref<128x512xf32, #tpu.memory_space<vmem>>, %arg3: memref<1x512xf32, #tpu.memory_space<vmem>>, %arg4: memref<1x128xf32, #tpu.memory_space<vmem>>, %arg5: memref<1x1xf32, #tpu.memory_space<vmem>>, %arg6: memref<2x1xf32, #tpu.memory_space<vmem>>, %arg7: memref<8x2x512xf32, #tpu.memory_space<vmem>>) attributes {dimension_semantics = [], scalar_prefetch = 0 : i64, scratch_operands = 1 : i64, tpu.core_type = #tpu.core_type<tc>} {
    %c0 = arith.constant 0 : index
    %c0_0 = arith.constant 0 : index
    %0 = vector.load %arg1[%c0, %c0_0] : memref<1x512xf32, #tpu.memory_space<vmem>>, vector<1x512xf32>
    %c0_1 = arith.constant 0 : index
    %c0_2 = arith.constant 0 : index
    %1 = vector.load %arg3[%c0_1, %c0_2] : memref<1x512xf32, #tpu.memory_space<vmem>>, vector<1x512xf32>
    %c0_3 = arith.constant 0 : index
    %c0_4 = arith.constant 0 : index
    %c0_5 = arith.constant 0 : index
    %2 = vector.load %arg0[%c0_3, %c0_4, %c0_5] : memref<8x2x1xf32, #tpu.memory_space<vmem>>, vector<8x2x1xf32>
    %3 = vector.shape_cast %0 : vector<1x512xf32> to vector<1x1x512xf32>
    %4 = vector.broadcast %2 : vector<8x2x1xf32> to vector<8x2x512xf32>
    %5 = vector.broadcast %3 : vector<1x1x512xf32> to vector<8x2x512xf32>
    %6 = arith.mulf %4, %5 : vector<8x2x512xf32>
    %7 = vector.shape_cast %1 : vector<1x512xf32> to vector<1x1x512xf32>
    %8 = vector.broadcast %7 : vector<1x1x512xf32> to vector<8x2x512xf32>
    %9 = arith.addf %6, %8 : vector<8x2x512xf32>
    %c0_6 = arith.constant 0 : index
    %c0_7 = arith.constant 0 : index
    %c0_8 = arith.constant 0 : index
    %10 = vector.load %arg7[%c0_6, %c0_7, %c0_8] : memref<8x2x512xf32, #tpu.memory_space<vmem>>, vector<8x2x512xf32>
    tpu.vector_store %arg7[%c0_6, %c0_7, %c0_8], %9 {strides = array<i32>} : memref<8x2x512xf32, #tpu.memory_space<vmem>>, vector<8x2x512xf32>,
    %c0_9 = arith.constant 0 : index
    %c0_10 = arith.constant 0 : index
    %11 = vector.load %arg2[%c0_9, %c0_10] : memref<128x512xf32, #tpu.memory_space<vmem>>, vector<128x512xf32>
    %cst = arith.constant 0.000000e+00 : f32
    %12 = vector.broadcast %cst : f32 to vector<2x128xf32>
    %cst_11 = arith.constant 0.000000e+00 : f32
    %13 = vector.broadcast %cst_11 : f32 to vector<2x128xf32>
    %c0_12 = arith.constant 0 : index
    %c0_13 = arith.constant 0 : index
    %c0_14 = arith.constant 0 : index
    %14 = vector.load %arg7[%c0_12, %c0_13, %c0_14] : memref<8x2x512xf32, #tpu.memory_space<vmem>>, vector<1x2x512xf32>
    %15 = vector.shape_cast %14 : vector<1x2x512xf32> to vector<2x512xf32>
    %cst_15 = arith.constant dense<0.000000e+00> : vector<2x512xf32>
    %16 = tpu.matmul %12, %11, %cst_15 {dimension_numbers = #tpu.dot_dimension_numbers<[1], [0], [0], [1], [0, 0, 1, 1], [], []>} : vector<2x128xf32>, vector<128x512xf32>, vector<2x512xf32> -> vector<2x512xf32>
    %17 = arith.addf %15, %16 : vector<2x512xf32>
    %18 = vector.extract_strided_slice %17 {offsets = [0, 0], sizes = [2, 256], strides = [1, 1]} : vector<2x512xf32> to vector<2x256xf32>
    %cst_16 = arith.constant 5.000000e-01 : f32
    %19 = vector.broadcast %cst_16 : f32 to vector<2x256xf32>
    %20 = arith.mulf %19, %18 : vector<2x256xf32>
    %21 = math.tanh %20 : vector<2x256xf32>
    %cst_17 = arith.constant 5.000000e-01 : f32
    %22 = vector.broadcast %cst_17 : f32 to vector<2x256xf32>
    %23 = arith.mulf %22, %21 : vector<2x256xf32>
    %cst_18 = arith.constant 5.000000e-01 : f32
    %24 = vector.broadcast %cst_18 : f32 to vector<2x256xf32>
    %25 = arith.addf %23, %24 : vector<2x256xf32>
    %26 = vector.extract_strided_slice %17 {offsets = [0, 256], sizes = [2, 128], strides = [1, 1]} : vector<2x512xf32> to vector<2x128xf32>
    %27 = math.tanh %26 : vector<2x128xf32>
    %28 = vector.extract_strided_slice %25 {offsets = [0, 128], sizes = [2, 128], strides = [1, 1]} : vector<2x256xf32> to vector<2x128xf32>
    %29 = arith.mulf %28, %13 : vector<2x128xf32>
    %30 = vector.extract_strided_slice %25 {offsets = [0, 0], sizes = [2, 128], strides = [1, 1]} : vector<2x256xf32> to vector<2x128xf32>
    %31 = arith.mulf %30, %27 : vector<2x128xf32>
    %32 = arith.addf %29, %31 : vector<2x128xf32>
    %33 = vector.extract_strided_slice %17 {offsets = [0, 384], sizes = [2, 128], strides = [1, 1]} : vector<2x512xf32> to vector<2x128xf32>
    %cst_19 = arith.constant 5.000000e-01 : f32
    %34 = vector.broadcast %cst_19 : f32 to vector<2x128xf32>
    %35 = arith.mulf %34, %33 : vector<2x128xf32>
    %36 = math.tanh %35 : vector<2x128xf32>
    %cst_20 = arith.constant 5.000000e-01 : f32
    %37 = vector.broadcast %cst_20 : f32 to vector<2x128xf32>
    %38 = arith.mulf %37, %36 : vector<2x128xf32>
    %cst_21 = arith.constant 5.000000e-01 : f32
    %39 = vector.broadcast %cst_21 : f32 to vector<2x128xf32>
    %40 = arith.addf %38, %39 : vector<2x128xf32>
    %41 = math.tanh %32 : vector<2x128xf32>
    %42 = arith.mulf %40, %41 : vector<2x128xf32>
    %c1 = arith.constant 1 : index
    %c0_22 = arith.constant 0 : index
    %c0_23 = arith.constant 0 : index
    %43 = vector.load %arg7[%c1, %c0_22, %c0_23] : memref<8x2x512xf32, #tpu.memory_space<vmem>>, vector<1x2x512xf32>
    %44 = vector.shape_cast %43 : vector<1x2x512xf32> to vector<2x512xf32>
    %cst_24 = arith.constant dense<0.000000e+00> : vector<2x512xf32>
    %45 = tpu.matmul %42, %11, %cst_24 {dimension_numbers = #tpu.dot_dimension_numbers<[1], [0], [0], [1], [0, 0, 1, 1], [], []>} : vector<2x128xf32>, vector<128x512xf32>, vector<2x512xf32> -> vector<2x512xf32>
    %46 = arith.addf %44, %45 : vector<2x512xf32>
    %47 = vector.extract_strided_slice %46 {offsets = [0, 0], sizes = [2, 256], strides = [1, 1]} : vector<2x512xf32> to vector<2x256xf32>
    %cst_25 = arith.constant 5.000000e-01 : f32
    %48 = vector.broadcast %cst_25 : f32 to vector<2x256xf32>
    %49 = arith.mulf %48, %47 : vector<2x256xf32>
    %50 = math.tanh %49 : vector<2x256xf32>
    %cst_26 = arith.constant 5.000000e-01 : f32
    %51 = vector.broadcast %cst_26 : f32 to vector<2x256xf32>
    %52 = arith.mulf %51, %50 : vector<2x256xf32>
    %cst_27 = arith.constant 5.000000e-01 : f32
    %53 = vector.broadcast %cst_27 : f32 to vector<2x256xf32>
    %54 = arith.addf %52, %53 : vector<2x256xf32>
    %55 = vector.extract_strided_slice %46 {offsets = [0, 256], sizes = [2, 128], strides = [1, 1]} : vector<2x512xf32> to vector<2x128xf32>
    %56 = math.tanh %55 : vector<2x128xf32>
    %57 = vector.extract_strided_slice %54 {offsets = [0, 128], sizes = [2, 128], strides = [1, 1]} : vector<2x256xf32> to vector<2x128xf32>
    %58 = arith.mulf %57, %32 : vector<2x128xf32>
    %59 = vector.extract_strided_slice %54 {offsets = [0, 0], sizes = [2, 128], strides = [1, 1]} : vector<2x256xf32> to vector<2x128xf32>
    %60 = arith.mulf %59, %56 : vector<2x128xf32>
    %61 = arith.addf %58, %60 : vector<2x128xf32>
    %62 = vector.extract_strided_slice %46 {offsets = [0, 384], sizes = [2, 128], strides = [1, 1]} : vector<2x512xf32> to vector<2x128xf32>
    %cst_28 = arith.constant 5.000000e-01 : f32
    %63 = vector.broadcast %cst_28 : f32 to vector<2x128xf32>
    %64 = arith.mulf %63, %62 : vector<2x128xf32>
    %65 = math.tanh %64 : vector<2x128xf32>
    %cst_29 = arith.constant 5.000000e-01 : f32
    %66 = vector.broadcast %cst_29 : f32 to vector<2x128xf32>
    %67 = arith.mulf %66, %65 : vector<2x128xf32>
    %cst_30 = arith.constant 5.000000e-01 : f32
    %68 = vector.broadcast %cst_30 : f32 to vector<2x128xf32>
    %69 = arith.addf %67, %68 : vector<2x128xf32>
    %70 = math.tanh %61 : vector<2x128xf32>
    %71 = arith.mulf %69, %70 : vector<2x128xf32>
    %c2 = arith.constant 2 : index
    %c0_31 = arith.constant 0 : index
    %c0_32 = arith.constant 0 : index
    %72 = vector.load %arg7[%c2, %c0_31, %c0_32] : memref<8x2x512xf32, #tpu.memory_space<vmem>>, vector<1x2x512xf32>
    %73 = vector.shape_cast %72 : vector<1x2x512xf32> to vector<2x512xf32>
    %cst_33 = arith.constant dense<0.000000e+00> : vector<2x512xf32>
    %74 = tpu.matmul %71, %11, %cst_33 {dimension_numbers = #tpu.dot_dimension_numbers<[1], [0], [0], [1], [0, 0, 1, 1], [], []>} : vector<2x128xf32>, vector<128x512xf32>, vector<2x512xf32> -> vector<2x512xf32>
    %75 = arith.addf %73, %74 : vector<2x512xf32>
    %76 = vector.extract_strided_slice %75 {offsets = [0, 0], sizes = [2, 256], strides = [1, 1]} : vector<2x512xf32> to vector<2x256xf32>
    %cst_34 = arith.constant 5.000000e-01 : f32
    %77 = vector.broadcast %cst_34 : f32 to vector<2x256xf32>
    %78 = arith.mulf %77, %76 : vector<2x256xf32>
    %79 = math.tanh %78 : vector<2x256xf32>
    %cst_35 = arith.constant 5.000000e-01 : f32
    %80 = vector.broadcast %cst_35 : f32 to vector<2x256xf32>
    %81 = arith.mulf %80, %79 : vector<2x256xf32>
    %cst_36 = arith.constant 5.000000e-01 : f32
    %82 = vector.broadcast %cst_36 : f32 to vector<2x256xf32>
    %83 = arith.addf %81, %82 : vector<2x256xf32>
    %84 = vector.extract_strided_slice %75 {offsets = [0, 256], sizes = [2, 128], strides = [1, 1]} : vector<2x512xf32> to vector<2x128xf32>
    %85 = math.tanh %84 : vector<2x128xf32>
    %86 = vector.extract_strided_slice %83 {offsets = [0, 128], sizes = [2, 128], strides = [1, 1]} : vector<2x256xf32> to vector<2x128xf32>
    %87 = arith.mulf %86, %61 : vector<2x128xf32>
    %88 = vector.extract_strided_slice %83 {offsets = [0, 0], sizes = [2, 128], strides = [1, 1]} : vector<2x256xf32> to vector<2x128xf32>
    %89 = arith.mulf %88, %85 : vector<2x128xf32>
    %90 = arith.addf %87, %89 : vector<2x128xf32>
    %91 = vector.extract_strided_slice %75 {offsets = [0, 384], sizes = [2, 128], strides = [1, 1]} : vector<2x512xf32> to vector<2x128xf32>
    %cst_37 = arith.constant 5.000000e-01 : f32
    %92 = vector.broadcast %cst_37 : f32 to vector<2x128xf32>
    %93 = arith.mulf %92, %91 : vector<2x128xf32>
    %94 = math.tanh %93 : vector<2x128xf32>
    %cst_38 = arith.constant 5.000000e-01 : f32
    %95 = vector.broadcast %cst_38 : f32 to vector<2x128xf32>
    %96 = arith.mulf %95, %94 : vector<2x128xf32>
    %cst_39 = arith.constant 5.000000e-01 : f32
    %97 = vector.broadcast %cst_39 : f32 to vector<2x128xf32>
    %98 = arith.addf %96, %97 : vector<2x128xf32>
    %99 = math.tanh %90 : vector<2x128xf32>
    %100 = arith.mulf %98, %99 : vector<2x128xf32>
    %c3 = arith.constant 3 : index
    %c0_40 = arith.constant 0 : index
    %c0_41 = arith.constant 0 : index
    %101 = vector.load %arg7[%c3, %c0_40, %c0_41] : memref<8x2x512xf32, #tpu.memory_space<vmem>>, vector<1x2x512xf32>
    %102 = vector.shape_cast %101 : vector<1x2x512xf32> to vector<2x512xf32>
    %cst_42 = arith.constant dense<0.000000e+00> : vector<2x512xf32>
    %103 = tpu.matmul %100, %11, %cst_42 {dimension_numbers = #tpu.dot_dimension_numbers<[1], [0], [0], [1], [0, 0, 1, 1], [], []>} : vector<2x128xf32>, vector<128x512xf32>, vector<2x512xf32> -> vector<2x512xf32>
    %104 = arith.addf %102, %103 : vector<2x512xf32>
    %105 = vector.extract_strided_slice %104 {offsets = [0, 0], sizes = [2, 256], strides = [1, 1]} : vector<2x512xf32> to vector<2x256xf32>
    %cst_43 = arith.constant 5.000000e-01 : f32
    %106 = vector.broadcast %cst_43 : f32 to vector<2x256xf32>
    %107 = arith.mulf %106, %105 : vector<2x256xf32>
    %108 = math.tanh %107 : vector<2x256xf32>
    %cst_44 = arith.constant 5.000000e-01 : f32
    %109 = vector.broadcast %cst_44 : f32 to vector<2x256xf32>
    %110 = arith.mulf %109, %108 : vector<2x256xf32>
    %cst_45 = arith.constant 5.000000e-01 : f32
    %111 = vector.broadcast %cst_45 : f32 to vector<2x256xf32>
    %112 = arith.addf %110, %111 : vector<2x256xf32>
    %113 = vector.extract_strided_slice %104 {offsets = [0, 256], sizes = [2, 128], strides = [1, 1]} : vector<2x512xf32> to vector<2x128xf32>
    %114 = math.tanh %113 : vector<2x128xf32>
    %115 = vector.extract_strided_slice %112 {offsets = [0, 128], sizes = [2, 128], strides = [1, 1]} : vector<2x256xf32> to vector<2x128xf32>
    %116 = arith.mulf %115, %90 : vector<2x128xf32>
    %117 = vector.extract_strided_slice %112 {offsets = [0, 0], sizes = [2, 128], strides = [1, 1]} : vector<2x256xf32> to vector<2x128xf32>
    %118 = arith.mulf %117, %114 : vector<2x128xf32>
    %119 = arith.addf %116, %118 : vector<2x128xf32>
    %120 = vector.extract_strided_slice %104 {offsets = [0, 384], sizes = [2, 128], strides = [1, 1]} : vector<2x512xf32> to vector<2x128xf32>
    %cst_46 = arith.constant 5.000000e-01 : f32
    %121 = vector.broadcast %cst_46 : f32 to vector<2x128xf32>
    %122 = arith.mulf %121, %120 : vector<2x128xf32>
    %123 = math.tanh %122 : vector<2x128xf32>
    %cst_47 = arith.constant 5.000000e-01 : f32
    %124 = vector.broadcast %cst_47 : f32 to vector<2x128xf32>
    %125 = arith.mulf %124, %123 : vector<2x128xf32>
    %cst_48 = arith.constant 5.000000e-01 : f32
    %126 = vector.broadcast %cst_48 : f32 to vector<2x128xf32>
    %127 = arith.addf %125, %126 : vector<2x128xf32>
    %128 = math.tanh %119 : vector<2x128xf32>
    %129 = arith.mulf %127, %128 : vector<2x128xf32>
    %c4 = arith.constant 4 : index
    %c0_49 = arith.constant 0 : index
    %c0_50 = arith.constant 0 : index
    %130 = vector.load %arg7[%c4, %c0_49, %c0_50] : memref<8x2x512xf32, #tpu.memory_space<vmem>>, vector<1x2x512xf32>
    %131 = vector.shape_cast %130 : vector<1x2x512xf32> to vector<2x512xf32>
    %cst_51 = arith.constant dense<0.000000e+00> : vector<2x512xf32>
    %132 = tpu.matmul %129, %11, %cst_51 {dimension_numbers = #tpu.dot_dimension_numbers<[1], [0], [0], [1], [0, 0, 1, 1], [], []>} : vector<2x128xf32>, vector<128x512xf32>, vector<2x512xf32> -> vector<2x512xf32>
    %133 = arith.addf %131, %132 : vector<2x512xf32>
    %134 = vector.extract_strided_slice %133 {offsets = [0, 0], sizes = [2, 256], strides = [1, 1]} : vector<2x512xf32> to vector<2x256xf32>
    %cst_52 = arith.constant 5.000000e-01 : f32
    %135 = vector.broadcast %cst_52 : f32 to vector<2x256xf32>
    %136 = arith.mulf %135, %134 : vector<2x256xf32>
    %137 = math.tanh %136 : vector<2x256xf32>
    %cst_53 = arith.constant 5.000000e-01 : f32
    %138 = vector.broadcast %cst_53 : f32 to vector<2x256xf32>
    %139 = arith.mulf %138, %137 : vector<2x256xf32>
    %cst_54 = arith.constant 5.000000e-01 : f32
    %140 = vector.broadcast %cst_54 : f32 to vector<2x256xf32>
    %141 = arith.addf %139, %140 : vector<2x256xf32>
    %142 = vector.extract_strided_slice %133 {offsets = [0, 256], sizes = [2, 128], strides = [1, 1]} : vector<2x512xf32> to vector<2x128xf32>
    %143 = math.tanh %142 : vector<2x128xf32>
    %144 = vector.extract_strided_slice %141 {offsets = [0, 128], sizes = [2, 128], strides = [1, 1]} : vector<2x256xf32> to vector<2x128xf32>
    %145 = arith.mulf %144, %119 : vector<2x128xf32>
    %146 = vector.extract_strided_slice %141 {offsets = [0, 0], sizes = [2, 128], strides = [1, 1]} : vector<2x256xf32> to vector<2x128xf32>
    %147 = arith.mulf %146, %143 : vector<2x128xf32>
    %148 = arith.addf %145, %147 : vector<2x128xf32>
    %149 = vector.extract_strided_slice %133 {offsets = [0, 384], sizes = [2, 128], strides = [1, 1]} : vector<2x512xf32> to vector<2x128xf32>
    %cst_55 = arith.constant 5.000000e-01 : f32
    %150 = vector.broadcast %cst_55 : f32 to vector<2x128xf32>
    %151 = arith.mulf %150, %149 : vector<2x128xf32>
    %152 = math.tanh %151 : vector<2x128xf32>
    %cst_56 = arith.constant 5.000000e-01 : f32
    %153 = vector.broadcast %cst_56 : f32 to vector<2x128xf32>
    %154 = arith.mulf %153, %152 : vector<2x128xf32>
    %cst_57 = arith.constant 5.000000e-01 : f32
    %155 = vector.broadcast %cst_57 : f32 to vector<2x128xf32>
    %156 = arith.addf %154, %155 : vector<2x128xf32>
    %157 = math.tanh %148 : vector<2x128xf32>
    %158 = arith.mulf %156, %157 : vector<2x128xf32>
    %c5 = arith.constant 5 : index
    %c0_58 = arith.constant 0 : index
    %c0_59 = arith.constant 0 : index
    %159 = vector.load %arg7[%c5, %c0_58, %c0_59] : memref<8x2x512xf32, #tpu.memory_space<vmem>>, vector<1x2x512xf32>
    %160 = vector.shape_cast %159 : vector<1x2x512xf32> to vector<2x512xf32>
    %cst_60 = arith.constant dense<0.000000e+00> : vector<2x512xf32>
    %161 = tpu.matmul %158, %11, %cst_60 {dimension_numbers = #tpu.dot_dimension_numbers<[1], [0], [0], [1], [0, 0, 1, 1], [], []>} : vector<2x128xf32>, vector<128x512xf32>, vector<2x512xf32> -> vector<2x512xf32>
    %162 = arith.addf %160, %161 : vector<2x512xf32>
    %163 = vector.extract_strided_slice %162 {offsets = [0, 0], sizes = [2, 256], strides = [1, 1]} : vector<2x512xf32> to vector<2x256xf32>
    %cst_61 = arith.constant 5.000000e-01 : f32
    %164 = vector.broadcast %cst_61 : f32 to vector<2x256xf32>
    %165 = arith.mulf %164, %163 : vector<2x256xf32>
    %166 = math.tanh %165 : vector<2x256xf32>
    %cst_62 = arith.constant 5.000000e-01 : f32
    %167 = vector.broadcast %cst_62 : f32 to vector<2x256xf32>
    %168 = arith.mulf %167, %166 : vector<2x256xf32>
    %cst_63 = arith.constant 5.000000e-01 : f32
    %169 = vector.broadcast %cst_63 : f32 to vector<2x256xf32>
    %170 = arith.addf %168, %169 : vector<2x256xf32>
    %171 = vector.extract_strided_slice %162 {offsets = [0, 256], sizes = [2, 128], strides = [1, 1]} : vector<2x512xf32> to vector<2x128xf32>
    %172 = math.tanh %171 : vector<2x128xf32>
    %173 = vector.extract_strided_slice %170 {offsets = [0, 128], sizes = [2, 128], strides = [1, 1]} : vector<2x256xf32> to vector<2x128xf32>
    %174 = arith.mulf %173, %148 : vector<2x128xf32>
    %175 = vector.extract_strided_slice %170 {offsets = [0, 0], sizes = [2, 128], strides = [1, 1]} : vector<2x256xf32> to vector<2x128xf32>
    %176 = arith.mulf %175, %172 : vector<2x128xf32>
    %177 = arith.addf %174, %176 : vector<2x128xf32>
    %178 = vector.extract_strided_slice %162 {offsets = [0, 384], sizes = [2, 128], strides = [1, 1]} : vector<2x512xf32> to vector<2x128xf32>
    %cst_64 = arith.constant 5.000000e-01 : f32
    %179 = vector.broadcast %cst_64 : f32 to vector<2x128xf32>
    %180 = arith.mulf %179, %178 : vector<2x128xf32>
    %181 = math.tanh %180 : vector<2x128xf32>
    %cst_65 = arith.constant 5.000000e-01 : f32
    %182 = vector.broadcast %cst_65 : f32 to vector<2x128xf32>
    %183 = arith.mulf %182, %181 : vector<2x128xf32>
    %cst_66 = arith.constant 5.000000e-01 : f32
    %184 = vector.broadcast %cst_66 : f32 to vector<2x128xf32>
    %185 = arith.addf %183, %184 : vector<2x128xf32>
    %186 = math.tanh %177 : vector<2x128xf32>
    %187 = arith.mulf %185, %186 : vector<2x128xf32>
    %c6 = arith.constant 6 : index
    %c0_67 = arith.constant 0 : index
    %c0_68 = arith.constant 0 : index
    %188 = vector.load %arg7[%c6, %c0_67, %c0_68] : memref<8x2x512xf32, #tpu.memory_space<vmem>>, vector<1x2x512xf32>
    %189 = vector.shape_cast %188 : vector<1x2x512xf32> to vector<2x512xf32>
    %cst_69 = arith.constant dense<0.000000e+00> : vector<2x512xf32>
    %190 = tpu.matmul %187, %11, %cst_69 {dimension_numbers = #tpu.dot_dimension_numbers<[1], [0], [0], [1], [0, 0, 1, 1], [], []>} : vector<2x128xf32>, vector<128x512xf32>, vector<2x512xf32> -> vector<2x512xf32>
    %191 = arith.addf %189, %190 : vector<2x512xf32>
    %192 = vector.extract_strided_slice %191 {offsets = [0, 0], sizes = [2, 256], strides = [1, 1]} : vector<2x512xf32> to vector<2x256xf32>
    %cst_70 = arith.constant 5.000000e-01 : f32
    %193 = vector.broadcast %cst_70 : f32 to vector<2x256xf32>
    %194 = arith.mulf %193, %192 : vector<2x256xf32>
    %195 = math.tanh %194 : vector<2x256xf32>
    %cst_71 = arith.constant 5.000000e-01 : f32
    %196 = vector.broadcast %cst_71 : f32 to vector<2x256xf32>
    %197 = arith.mulf %196, %195 : vector<2x256xf32>
    %cst_72 = arith.constant 5.000000e-01 : f32
    %198 = vector.broadcast %cst_72 : f32 to vector<2x256xf32>
    %199 = arith.addf %197, %198 : vector<2x256xf32>
    %200 = vector.extract_strided_slice %191 {offsets = [0, 256], sizes = [2, 128], strides = [1, 1]} : vector<2x512xf32> to vector<2x128xf32>
    %201 = math.tanh %200 : vector<2x128xf32>
    %202 = vector.extract_strided_slice %199 {offsets = [0, 128], sizes = [2, 128], strides = [1, 1]} : vector<2x256xf32> to vector<2x128xf32>
    %203 = arith.mulf %202, %177 : vector<2x128xf32>
    %204 = vector.extract_strided_slice %199 {offsets = [0, 0], sizes = [2, 128], strides = [1, 1]} : vector<2x256xf32> to vector<2x128xf32>
    %205 = arith.mulf %204, %201 : vector<2x128xf32>
    %206 = arith.addf %203, %205 : vector<2x128xf32>
    %207 = vector.extract_strided_slice %191 {offsets = [0, 384], sizes = [2, 128], strides = [1, 1]} : vector<2x512xf32> to vector<2x128xf32>
    %cst_73 = arith.constant 5.000000e-01 : f32
    %208 = vector.broadcast %cst_73 : f32 to vector<2x128xf32>
    %209 = arith.mulf %208, %207 : vector<2x128xf32>
    %210 = math.tanh %209 : vector<2x128xf32>
    %cst_74 = arith.constant 5.000000e-01 : f32
    %211 = vector.broadcast %cst_74 : f32 to vector<2x128xf32>
    %212 = arith.mulf %211, %210 : vector<2x128xf32>
    %cst_75 = arith.constant 5.000000e-01 : f32
    %213 = vector.broadcast %cst_75 : f32 to vector<2x128xf32>
    %214 = arith.addf %212, %213 : vector<2x128xf32>
    %215 = math.tanh %206 : vector<2x128xf32>
    %216 = arith.mulf %214, %215 : vector<2x128xf32>
    %c7 = arith.constant 7 : index
    %c0_76 = arith.constant 0 : index
    %c0_77 = arith.constant 0 : index
    %217 = vector.load %arg7[%c7, %c0_76, %c0_77] : memref<8x2x512xf32, #tpu.memory_space<vmem>>, vector<1x2x512xf32>
    %218 = vector.shape_cast %217 : vector<1x2x512xf32> to vector<2x512xf32>
    %cst_78 = arith.constant dense<0.000000e+00> : vector<2x512xf32>
    %219 = tpu.matmul %216, %11, %cst_78 {dimension_numbers = #tpu.dot_dimension_numbers<[1], [0], [0], [1], [0, 0, 1, 1], [], []>} : vector<2x128xf32>, vector<128x512xf32>, vector<2x512xf32> -> vector<2x512xf32>
    %220 = arith.addf %218, %219 : vector<2x512xf32>
    %221 = vector.extract_strided_slice %220 {offsets = [0, 0], sizes = [2, 256], strides = [1, 1]} : vector<2x512xf32> to vector<2x256xf32>
    %cst_79 = arith.constant 5.000000e-01 : f32
    %222 = vector.broadcast %cst_79 : f32 to vector<2x256xf32>
    %223 = arith.mulf %222, %221 : vector<2x256xf32>
    %224 = math.tanh %223 : vector<2x256xf32>
    %cst_80 = arith.constant 5.000000e-01 : f32
    %225 = vector.broadcast %cst_80 : f32 to vector<2x256xf32>
    %226 = arith.mulf %225, %224 : vector<2x256xf32>
    %cst_81 = arith.constant 5.000000e-01 : f32
    %227 = vector.broadcast %cst_81 : f32 to vector<2x256xf32>
    %228 = arith.addf %226, %227 : vector<2x256xf32>
    %229 = vector.extract_strided_slice %220 {offsets = [0, 256], sizes = [2, 128], strides = [1, 1]} : vector<2x512xf32> to vector<2x128xf32>
    %230 = math.tanh %229 : vector<2x128xf32>
    %231 = vector.extract_strided_slice %228 {offsets = [0, 128], sizes = [2, 128], strides = [1, 1]} : vector<2x256xf32> to vector<2x128xf32>
    %232 = arith.mulf %231, %206 : vector<2x128xf32>
    %233 = vector.extract_strided_slice %228 {offsets = [0, 0], sizes = [2, 128], strides = [1, 1]} : vector<2x256xf32> to vector<2x128xf32>
    %234 = arith.mulf %233, %230 : vector<2x128xf32>
    %235 = arith.addf %232, %234 : vector<2x128xf32>
    %236 = vector.extract_strided_slice %220 {offsets = [0, 384], sizes = [2, 128], strides = [1, 1]} : vector<2x512xf32> to vector<2x128xf32>
    %cst_82 = arith.constant 5.000000e-01 : f32
    %237 = vector.broadcast %cst_82 : f32 to vector<2x128xf32>
    %238 = arith.mulf %237, %236 : vector<2x128xf32>
    %239 = math.tanh %238 : vector<2x128xf32>
    %cst_83 = arith.constant 5.000000e-01 : f32
    %240 = vector.broadcast %cst_83 : f32 to vector<2x128xf32>
    %241 = arith.mulf %240, %239 : vector<2x128xf32>
    %cst_84 = arith.constant 5.000000e-01 : f32
    %242 = vector.broadcast %cst_84 : f32 to vector<2x128xf32>
    %243 = arith.addf %241, %242 : vector<2x128xf32>
    %244 = math.tanh %235 : vector<2x128xf32>
    %245 = arith.mulf %243, %244 : vector<2x128xf32>
    %c0_85 = arith.constant 0 : index
    %c0_86 = arith.constant 0 : index
    %246 = vector.load %arg4[%c0_85, %c0_86] : memref<1x128xf32, #tpu.memory_space<vmem>>, vector<1x128xf32>
    %247 = vector.broadcast %246 : vector<1x128xf32> to vector<2x128xf32>
    %248 = arith.mulf %245, %247 : vector<2x128xf32>
    %cst_87 = arith.constant dense<0.000000e+00> : vector<2xf32>
    %249 = vector.multi_reduction <add>, %248, %cst_87 [1] : vector<2x128xf32> to vector<2xf32>
    %250 = vector.shape_cast %249 : vector<2xf32> to vector<2x1xf32>
    %c0_88 = arith.constant 0 : index
    %c0_89 = arith.constant 0 : index
    %251 = vector.load %arg5[%c0_88, %c0_89] : memref<1x1xf32, #tpu.memory_space<vmem>>, vector<1x1xf32>
    %252 = vector.broadcast %251 : vector<1x1xf32> to vector<2x1xf32>
    %253 = arith.addf %250, %252 : vector<2x1xf32>
    %c0_90 = arith.constant 0 : index
    %c0_91 = arith.constant 0 : index
    %254 = vector.load %arg6[%c0_90, %c0_91] : memref<2x1xf32, #tpu.memory_space<vmem>>, vector<2x1xf32>
    tpu.vector_store %arg6[%c0_90, %c0_91], %253 {strides = array<i32>} : memref<2x1xf32, #tpu.memory_space<vmem>>, vector<2x1xf32>,
    return
  }
}

</mosaic_0001>

<llo_original>
// kernel: stock_lstm_forward.1
$region0: #{stock_lstm_forward.1}
  #allocation0 [shape = 'u32[]', space=smem, size = 0x4, offset = 0x4, fixed_abs, tag = 'smem constant byte address 0x4 - core index']
  #allocation1 [shape = 'u32[144,128]{1,0:T(1,128)}', space=vmem, size = 0x12000, scoped, tag = 'internal scratch']
  #allocation2 [shape = 'f32[8,2,512]{2,1,0:T(2,128)}', space=vmem, size = 0x8000, scoped, tag = 'scratch operand']
  #allocation3 [shape = 'f32[1,1]{1,0:T(1,128)S(1)}', space=vmem, size = 0x200, scoped, tag = 'scoped memory for stock_lstm_forward.1']
  %s0 = inlined_call_operand.vmem [shape: f32[8,2,1], index: 0, kind: input, shape index: {}]
  %s1 = inlined_call_operand.vmem [shape: f32[1,512], index: 1, kind: input, shape index: {}]
  %s2 = inlined_call_operand.hbm [shape: f32[128,512], index: 2, kind: input, shape index: {}]
  %s3 = inlined_call_operand.vmem [shape: f32[1,512], index: 3, kind: input, shape index: {}]
  %s4 = inlined_call_operand.vmem [shape: f32[1,128], index: 4, kind: input, shape index: {}]
  %s5 = inlined_call_operand.<no memory space> [shape: f32[1,1], index: 5, kind: input, shape index: {}]
  %s6 = inlined_call_operand.vmem [shape: f32[2,1], index: 6, kind: output, shape index: {}]
  %s7 = sld [smem:[#allocation0]]
  $region38: #{stock_lstm_forward.1} parent=0
    _
  %s9 = ssub.s32 1, %s7
  %s10 = scalar_select 0, %s9, %s7
  %v11 = vstv %s5
  %12 = vst [vmem:[#allocation3] sm:$0x1] %v11
  $region1: #{stock_lstm_forward.1} parent=0
    #allocation4 [shape = 'u8[262144]{0}', space=vmem, size = 0x40000, scoped, tag = 'input window, operand 2, single buffered']
    #allocation5 [shape = 's32[1]{0}', space=sflag, size = 0x4, scoped, tag = 'scoped memory for stock_lstm_forward.1']
    %13 = vsyncpa [#allocation5], 0
    // Predicated region
    $region2: #{stock_lstm_forward.1} parent=1 // pred_check
      _
    $region3: #{stock_lstm_forward.1} parent=1 // pred_check_branch
      %15 = sbr.rel (0) target = $region5
    $region4: #{stock_lstm_forward.1} parent=1 // pred_region
      _
    $region5: #{stock_lstm_forward.1} parent=1 // pred_fallthru
      _
    // Predicated region
    $region6: #{stock_lstm_forward.1} parent=1 // pred_check
      _
    $region7: #{stock_lstm_forward.1} parent=1 // pred_check_branch
      %17 = sbr.rel (0) target = $region9
    $region8: #{stock_lstm_forward.1} parent=1 // pred_region
      _
    $region9: #{stock_lstm_forward.1} parent=1 // pred_fallthru
      _
    // Predicated region
    $region10: #{stock_lstm_forward.1} parent=1 // pred_check
      _
    $region11: #{stock_lstm_forward.1} parent=1 // pred_check_branch
      %19 = sbr.rel (0) target = $region13
    $region12: #{stock_lstm_forward.1} parent=1 // pred_region
      %s21 = ssub.s32 8192, 8192
      %22 = vsyncadd [#allocation5], %s21
      %s23 = sshll.u32 [#allocation4], 4
      %s24 = int_to_ptr.vmem [resolvable:$true] %s23
      %29 = dma.hbm_to_vmem [thread:$0]  %s2, 8192, %s24, [#allocation5], 512, 512, 32
    $region13: #{stock_lstm_forward.1} parent=1 // pred_fallthru
      _
    // Predicated region
    $region14: #{stock_lstm_forward.1} parent=1 // pred_check
      _
    $region15: #{stock_lstm_forward.1} parent=1 // pred_check_branch
      %31 = sbr.rel (0) target = $region17
    $region16: #{stock_lstm_forward.1} parent=1 // pred_region
      _
    $region17: #{stock_lstm_forward.1} parent=1 // pred_fallthru
      _
    // Predicated region
    $region18: #{stock_lstm_forward.1} parent=1 // pred_check
      _
    $region19: #{stock_lstm_forward.1} parent=1 // pred_check_branch
      %33 = sbr.rel (0) target = $region21
    $region20: #{stock_lstm_forward.1} parent=1 // pred_region
      _
    $region21: #{stock_lstm_forward.1} parent=1 // pred_fallthru
      _
    // Predicated region
    $region22: #{stock_lstm_forward.1} parent=1 // pred_check
      _
    $region23: #{stock_lstm_forward.1} parent=1 // pred_check_branch
      %35 = sbr.rel (0) target = $region25
    $region24: #{stock_lstm_forward.1} parent=1 // pred_region
      _
    $region25: #{stock_lstm_forward.1} parent=1 // pred_fallthru
      _
    // Predicated region
    $region26: #{stock_lstm_forward.1} parent=1 // pred_check
      _
    $region27: #{stock_lstm_forward.1} parent=1 // pred_check_branch
      %37 = sbr.rel (0) target = $region29
    $region28: #{stock_lstm_forward.1} parent=1 // pred_region
      %38 = dma.done [#allocation5], 8192
    $region29: #{stock_lstm_forward.1} parent=1 // pred_fallthru
      _
    %v39 = vld [vmem:[%s1] sm:$0xf]
    %v40 = vld [vmem:[%s3] sm:$0xf]
    %v41 = vld [vmem:[%s0] sm:$0x3]
    %v42 = vld [vmem:[%s0 + $0x2] sm:$0x3]
    %v43 = vld [vmem:[%s0 + $0x4] sm:$0x3]
    %v44 = vld [vmem:[%s0 + $0x6] sm:$0x3]
    %v45 = vld [vmem:[%s0 + $0x8] sm:$0x3]
    %v46 = vld [vmem:[%s0 + $0xa] sm:$0x3]
    %v47 = vld [vmem:[%s0 + $0xc] sm:$0x3]
    %v48 = vld [vmem:[%s0 + $0xe] sm:$0x3]
    %50 = vset.pattern.permute.xlu0 0
    %51 = vperm.xlu0 %50, %v41
    %v52 = vpop.permute.xlu0 %51
    %55 = vset.pattern.permute.xlu0 0
    %56 = vperm.xlu0 %55, %v42
    %v57 = vpop.permute.xlu0 %56
    %60 = vset.pattern.permute.xlu0 0
    %61 = vperm.xlu0 %60, %v43
    %v62 = vpop.permute.xlu0 %61
    %65 = vset.pattern.permute.xlu0 0
    %66 = vperm.xlu0 %65, %v44
    %v67 = vpop.permute.xlu0 %66
    %70 = vset.pattern.permute.xlu0 0
    %71 = vperm.xlu0 %70, %v45
    %v72 = vpop.permute.xlu0 %71
    %75 = vset.pattern.permute.xlu0 0
    %76 = vperm.xlu0 %75, %v46
    %v77 = vpop.permute.xlu0 %76
    %80 = vset.pattern.permute.xlu0 0
    %81 = vperm.xlu0 %80, %v47
    %v82 = vpop.permute.xlu0 %81
    %85 = vset.pattern.permute.xlu0 0
    %86 = vperm.xlu0 %85, %v48
    %v87 = vpop.permute.xlu0 %86
    %v90 = vlaneseq
    %v91 = vshrl.u32 %v90, 7
    %v92 = vsub.s32 0, %v91
    %v93 = vrot.slane %v39, %v92
    %v94 = vlaneseq
    %v95 = vshrl.u32 %v94, 7
    %v96 = vsub.s32 1, %v95
    %v97 = vrot.slane %v39, %v96
    %v98 = vlaneseq
    %v99 = vshrl.u32 %v98, 7
    %v100 = vsub.s32 2, %v99
    %v101 = vrot.slane %v39, %v100
    %v102 = vlaneseq
    %v103 = vshrl.u32 %v102, 7
    %v104 = vsub.s32 3, %v103
    %v105 = vrot.slane %v39, %v104
    %v110 = vmul.f32 %v52, %v93
    %v111 = vmul.f32 %v52, %v97
    %v112 = vmul.f32 %v52, %v101
    %v113 = vmul.f32 %v52, %v105
    %v114 = vmul.f32 %v57, %v93
    %v115 = vmul.f32 %v57, %v97
    %v116 = vmul.f32 %v57, %v101
    %v117 = vmul.f32 %v57, %v105
    %v118 = vmul.f32 %v62, %v93
    %v119 = vmul.f32 %v62, %v97
    %v120 = vmul.f32 %v62, %v101
    %v121 = vmul.f32 %v62, %v105
    %v122 = vmul.f32 %v67, %v93
    %v123 = vmul.f32 %v67, %v97
    %v124 = vmul.f32 %v67, %v101
    %v125 = vmul.f32 %v67, %v105
    %v126 = vmul.f32 %v72, %v93
    %v127 = vmul.f32 %v72, %v97
    %v128 = vmul.f32 %v72, %v101
    %v129 = vmul.f32 %v72, %v105
    %v130 = vmul.f32 %v77, %v93
    %v131 = vmul.f32 %v77, %v97
    %v132 = vmul.f32 %v77, %v101
    %v133 = vmul.f32 %v77, %v105
    %v134 = vmul.f32 %v82, %v93
    %v135 = vmul.f32 %v82, %v97
    %v136 = vmul.f32 %v82, %v101
    %v137 = vmul.f32 %v82, %v105
    %v138 = vmul.f32 %v87, %v93
    %v139 = vmul.f32 %v87, %v97
    %v140 = vmul.f32 %v87, %v101
    %v141 = vmul.f32 %v87, %v105
    %v143 = vlaneseq
    %v144 = vshrl.u32 %v143, 7
    %v145 = vsub.s32 0, %v144
    %v146 = vrot.slane %v40, %v145
    %v147 = vlaneseq
    %v148 = vshrl.u32 %v147, 7
    %v149 = vsub.s32 1, %v148
    %v150 = vrot.slane %v40, %v149
    %v151 = vlaneseq
    %v152 = vshrl.u32 %v151, 7
    %v153 = vsub.s32 2, %v152
    %v154 = vrot.slane %v40, %v153
    %v155 = vlaneseq
    %v156 = vshrl.u32 %v155, 7
    %v157 = vsub.s32 3, %v156
    %v158 = vrot.slane %v40, %v157
    %v163 = vadd.f32 %v110, %v146
    %v164 = vadd.f32 %v111, %v150
    %v165 = vadd.f32 %v112, %v154
    %v166 = vadd.f32 %v113, %v158
    %v167 = vadd.f32 %v114, %v146
    %v168 = vadd.f32 %v115, %v150
    %v169 = vadd.f32 %v116, %v154
    %v170 = vadd.f32 %v117, %v158
    %v171 = vadd.f32 %v118, %v146
    %v172 = vadd.f32 %v119, %v150
    %v173 = vadd.f32 %v120, %v154
    %v174 = vadd.f32 %v121, %v158
    %v175 = vadd.f32 %v122, %v146
    %v176 = vadd.f32 %v123, %v150
    %v177 = vadd.f32 %v124, %v154
    %v178 = vadd.f32 %v125, %v158
    %v179 = vadd.f32 %v126, %v146
    %v180 = vadd.f32 %v127, %v150
    %v181 = vadd.f32 %v128, %v154
    %v182 = vadd.f32 %v129, %v158
    %v183 = vadd.f32 %v130, %v146
    %v184 = vadd.f32 %v131, %v150
    %v185 = vadd.f32 %v132, %v154
    %v186 = vadd.f32 %v133, %v158
    %v187 = vadd.f32 %v134, %v146
    %v188 = vadd.f32 %v135, %v150
    %v189 = vadd.f32 %v136, %v154
    %v190 = vadd.f32 %v137, %v158
    %v191 = vadd.f32 %v138, %v146
    %v192 = vadd.f32 %v139, %v150
    %v193 = vadd.f32 %v140, %v154
    %v194 = vadd.f32 %v141, %v158
    %v227 = vcombine.low %v163, %v164
    %v228 = vcombine.low %v165, %v166
    %v230 = vunpack.c.l.s4 1983009808
    %v231 = vunpack.c.0.s8 %v230
    %v232 = vlaneseq
    %v233 = vshrl.u32 %v232, 7
    %v234 = vsub.s32 %v231, %v233
    %v235 = vrot.slane %v227, %v234
    %v237 = vunpack.c.l.s4 1983009808
    %v238 = vunpack.c.0.s8 %v237
    %v239 = vlaneseq
    %v240 = vshrl.u32 %v239, 7
    %v241 = vsub.s32 %v238, %v240
    %v242 = vrot.slane %v228, %v241
    %v243 = vcombine.low %v235, %v242
    %v244 = vcombine.low %v167, %v168
    %v245 = vcombine.low %v169, %v170
    %v247 = vunpack.c.l.s4 1983009808
    %v248 = vunpack.c.0.s8 %v247
    %v249 = vlaneseq
    %v250 = vshrl.u32 %v249, 7
    %v251 = vsub.s32 %v248, %v250
    %v252 = vrot.slane %v244, %v251
    %v254 = vunpack.c.l.s4 1983009808
    %v255 = vunpack.c.0.s8 %v254
    %v256 = vlaneseq
    %v257 = vshrl.u32 %v256, 7
    %v258 = vsub.s32 %v255, %v257
    %v259 = vrot.slane %v245, %v258
    %v260 = vcombine.low %v252, %v259
    %v261 = vcombine.low %v171, %v172
    %v262 = vcombine.low %v173, %v174
    %v264 = vunpack.c.l.s4 1983009808
    %v265 = vunpack.c.0.s8 %v264
    %v266 = vlaneseq
    %v267 = vshrl.u32 %v266, 7
    %v268 = vsub.s32 %v265, %v267
    %v269 = vrot.slane %v261, %v268
    %v271 = vunpack.c.l.s4 1983009808
    %v272 = vunpack.c.0.s8 %v271
    %v273 = vlaneseq
    %v274 = vshrl.u32 %v273, 7
    %v275 = vsub.s32 %v272, %v274
    %v276 = vrot.slane %v262, %v275
    %v277 = vcombine.low %v269, %v276
    %v278 = vcombine.low %v175, %v176
    %v279 = vcombine.low %v177, %v178
    %v281 = vunpack.c.l.s4 1983009808
    %v282 = vunpack.c.0.s8 %v281
    %v283 = vlaneseq
    %v284 = vshrl.u32 %v283, 7
    %v285 = vsub.s32 %v282, %v284
    %v286 = vrot.slane %v278, %v285
    %v288 = vunpack.c.l.s4 1983009808
    %v289 = vunpack.c.0.s8 %v288
    %v290 = vlaneseq
    %v291 = vshrl.u32 %v290, 7
    %v292 = vsub.s32 %v289, %v291
    %v293 = vrot.slane %v279, %v292
    %v294 = vcombine.low %v286, %v293
    %v295 = vcombine.low %v179, %v180
    %v296 = vcombine.low %v181, %v182
    %v298 = vunpack.c.l.s4 1983009808
    %v299 = vunpack.c.0.s8 %v298
    %v300 = vlaneseq
    %v301 = vshrl.u32 %v300, 7
    %v302 = vsub.s32 %v299, %v301
    %v303 = vrot.slane %v295, %v302
    %v305 = vunpack.c.l.s4 1983009808
    %v306 = vunpack.c.0.s8 %v305
    %v307 = vlaneseq
    %v308 = vshrl.u32 %v307, 7
    %v309 = vsub.s32 %v306, %v308
    %v310 = vrot.slane %v296, %v309
    %v311 = vcombine.low %v303, %v310
    %v312 = vcombine.low %v183, %v184
    %v313 = vcombine.low %v185, %v186
    %v315 = vunpack.c.l.s4 1983009808
    %v316 = vunpack.c.0.s8 %v315
    %v317 = vlaneseq
    %v318 = vshrl.u32 %v317, 7
    %v319 = vsub.s32 %v316, %v318
    %v320 = vrot.slane %v312, %v319
    %v322 = vunpack.c.l.s4 1983009808
    %v323 = vunpack.c.0.s8 %v322
    %v324 = vlaneseq
    %v325 = vshrl.u32 %v324, 7
    %v326 = vsub.s32 %v323, %v325
    %v327 = vrot.slane %v313, %v326
    %v328 = vcombine.low %v320, %v327
    %v329 = vcombine.low %v187, %v188
    %v330 = vcombine.low %v189, %v190
    %v332 = vunpack.c.l.s4 1983009808
    %v333 = vunpack.c.0.s8 %v332
    %v334 = vlaneseq
    %v335 = vshrl.u32 %v334, 7
    %v336 = vsub.s32 %v333, %v335
    %v337 = vrot.slane %v329, %v336
    %v339 = vunpack.c.l.s4 1983009808
    %v340 = vunpack.c.0.s8 %v339
    %v341 = vlaneseq
    %v342 = vshrl.u32 %v341, 7
    %v343 = vsub.s32 %v340, %v342
    %v344 = vrot.slane %v330, %v343
    %v345 = vcombine.low %v337, %v344
    %v346 = vcombine.low %v191, %v192
    %v347 = vcombine.low %v193, %v194
    %v349 = vunpack.c.l.s4 1983009808
    %v350 = vunpack.c.0.s8 %v349
    %v351 = vlaneseq
    %v352 = vshrl.u32 %v351, 7
    %v353 = vsub.s32 %v350, %v352
    %v354 = vrot.slane %v346, %v353
    %v356 = vunpack.c.l.s4 1983009808
    %v357 = vunpack.c.0.s8 %v356
    %v358 = vlaneseq
    %v359 = vshrl.u32 %v358, 7
    %v360 = vsub.s32 %v357, %v359
    %v361 = vrot.slane %v347, %v360
    %v362 = vcombine.low %v354, %v361
    %371 = vst [vmem:[#allocation2] sm:$0xff] %v243
    %372 = vst [vmem:[#allocation2 + $0x8] sm:$0xff] %v260
    %373 = vst [vmem:[#allocation2 + $0x10] sm:$0xff] %v277
    %374 = vst [vmem:[#allocation2 + $0x18] sm:$0xff] %v294
    %375 = vst [vmem:[#allocation2 + $0x20] sm:$0xff] %v311
    %376 = vst [vmem:[#allocation2 + $0x28] sm:$0xff] %v328
    %377 = vst [vmem:[#allocation2 + $0x30] sm:$0xff] %v345
    %378 = vst [vmem:[#allocation2 + $0x38] sm:$0xff] %v362
    %v379 = vld [vmem:[#allocation4] sm:$0xff]
    %v380 = vld [vmem:[#allocation4 + $0x8] sm:$0xff]
    %v381 = vld [vmem:[#allocation4 + $0x10] sm:$0xff]
    %v382 = vld [vmem:[#allocation4 + $0x18] sm:$0xff]
    %v383 = vld [vmem:[#allocation4 + $0x20] sm:$0xff]
    %v384 = vld [vmem:[#allocation4 + $0x28] sm:$0xff]
    %v385 = vld [vmem:[#allocation4 + $0x30] sm:$0xff]
    %v386 = vld [vmem:[#allocation4 + $0x38] sm:$0xff]
    %v387 = vld [vmem:[#allocation4 + $0x40] sm:$0xff]
    %v388 = vld [vmem:[#allocation4 + $0x48] sm:$0xff]
    %v389 = vld [vmem:[#allocation4 + $0x50] sm:$0xff]
    %v390 = vld [vmem:[#allocation4 + $0x58] sm:$0xff]
    %v391 = vld [vmem:[#allocation4 + $0x60] sm:$0xff]
    %v392 = vld [vmem:[#allocation4 + $0x68] sm:$0xff]
    %v393 = vld [vmem:[#allocation4 + $0x70] sm:$0xff]
    %v394 = vld [vmem:[#allocation4 + $0x78] sm:$0xff]
    %v395 = vld [vmem:[#allocation4 + $0x80] sm:$0xff]
    %v396 = vld [vmem:[#allocation4 + $0x88] sm:$0xff]
    %v397 = vld [vmem:[#allocation4 + $0x90] sm:$0xff]
    %v398 = vld [vmem:[#allocation4 + $0x98] sm:$0xff]
    %v399 = vld [vmem:[#allocation4 + $0xa0] sm:$0xff]
    %v400 = vld [vmem:[#allocation4 + $0xa8] sm:$0xff]
    %v401 = vld [vmem:[#allocation4 + $0xb0] sm:$0xff]
    %v402 = vld [vmem:[#allocation4 + $0xb8] sm:$0xff]
    %v403 = vld [vmem:[#allocation4 + $0xc0] sm:$0xff]
    %v404 = vld [vmem:[#allocation4 + $0xc8] sm:$0xff]
    %v405 = vld [vmem:[#allocation4 + $0xd0] sm:$0xff]
    %v406 = vld [vmem:[#allocation4 + $0xd8] sm:$0xff]
    %v407 = vld [vmem:[#allocation4 + $0xe0] sm:$0xff]
    %v408 = vld [vmem:[#allocation4 + $0xe8] sm:$0xff]
    %v409 = vld [vmem:[#allocation4 + $0xf0] sm:$0xff]
    %v410 = vld [vmem:[#allocation4 + $0xf8] sm:$0xff]
    %v411 = vld [vmem:[#allocation4 + $0x100] sm:$0xff]
    %v412 = vld [vmem:[#allocation4 + $0x108] sm:$0xff]
    %v413 = vld [vmem:[#allocation4 + $0x110] sm:$0xff]
    %v414 = vld [vmem:[#allocation4 + $0x118] sm:$0xff]
    %v415 = vld [vmem:[#allocation4 + $0x120] sm:$0xff]
    %v416 = vld [vmem:[#allocation4 + $0x128] sm:$0xff]
    %v417 = vld [vmem:[#allocation4 + $0x130] sm:$0xff]
    %v418 = vld [vmem:[#allocation4 + $0x138] sm:$0xff]
    %v419 = vld [vmem:[#allocation4 + $0x140] sm:$0xff]
    %v420 = vld [vmem:[#allocation4 + $0x148] sm:$0xff]
    %v421 = vld [vmem:[#allocation4 + $0x150] sm:$0xff]
    %v422 = vld [vmem:[#allocation4 + $0x158] sm:$0xff]
    %v423 = vld [vmem:[#allocation4 + $0x160] sm:$0xff]
    %v424 = vld [vmem:[#allocation4 + $0x168] sm:$0xff]
    %v425 = vld [vmem:[#allocation4 + $0x170] sm:$0xff]
    %v426 = vld [vmem:[#allocation4 + $0x178] sm:$0xff]
    %v427 = vld [vmem:[#allocation4 + $0x180] sm:$0xff]
    %v428 = vld [vmem:[#allocation4 + $0x188] sm:$0xff]
    %v429 = vld [vmem:[#allocation4 + $0x190] sm:$0xff]
    %v430 = vld [vmem:[#allocation4 + $0x198] sm:$0xff]
    %v431 = vld [vmem:[#allocation4 + $0x1a0] sm:$0xff]
    %v432 = vld [vmem:[#allocation4 + $0x1a8] sm:$0xff]
    %v433 = vld [vmem:[#allocation4 + $0x1b0] sm:$0xff]
    %v434 = vld [vmem:[#allocation4 + $0x1b8] sm:$0xff]
    %v435 = vld [vmem:[#allocation4 + $0x1c0] sm:$0xff]
    %v436 = vld [vmem:[#allocation4 + $0x1c8] sm:$0xff]
    %v437 = vld [vmem:[#allocation4 + $0x1d0] sm:$0xff]
    %v438 = vld [vmem:[#allocation4 + $0x1d8] sm:$0xff]
    %v439 = vld [vmem:[#allocation4 + $0x1e0] sm:$0xff]
    %v440 = vld [vmem:[#allocation4 + $0x1e8] sm:$0xff]
    %v441 = vld [vmem:[#allocation4 + $0x1f0] sm:$0xff]
    %v442 = vld [vmem:[#allocation4 + $0x1f8] sm:$0xff]
    %v443 = vld [vmem:[#allocation2] sm:$0xff]
    %444 = vmatprep.subr.mxu0 %v380
    %445 = vmatpush1.msra.mxu0 %v379
    %446 = vmatprep.subr.mxu0 %v384
    %447 = vmatpush1.msra.mxu0 %v383
    %448 = vmatprep.subr.mxu0 %v388
    %449 = vmatpush1.msra.mxu0 %v387
    %450 = vmatprep.subr.mxu0 %v392
    %451 = vmatpush1.msra.mxu0 %v391
    %452 = vmatprep.subr.mxu0 %v396
    %453 = vmatpush1.msra.mxu0 %v395
    %454 = vmatprep.subr.mxu0 %v400
    %455 = vmatpush1.msra.mxu0 %v399
    %456 = vmatprep.subr.mxu0 %v404
    %457 = vmatpush1.msra.mxu0 %v403
    %458 = vmatprep.subr.mxu0 %v408
    %459 = vmatpush1.msra.mxu0 %v407
    %460 = vmatprep.subr.mxu0 %v412
    %461 = vmatpush1.msra.mxu0 %v411
    %462 = vmatprep.subr.mxu0 %v416
    %463 = vmatpush1.msra.mxu0 %v415
    %464 = vmatprep.subr.mxu0 %v420
    %465 = vmatpush1.msra.mxu0 %v419
    %466 = vmatprep.subr.mxu0 %v424
    %467 = vmatpush1.msra.mxu0 %v423
    %468 = vmatprep.subr.mxu0 %v428
    %469 = vmatpush1.msra.mxu0 %v427
    %470 = vmatprep.subr.mxu0 %v432
    %471 = vmatpush1.msra.mxu0 %v431
    %472 = vmatprep.subr.mxu0 %v436
    %473 = vmatpush1.msra.mxu0 %v435
    %474 = vmatprep.subr.mxu0 %v440
    %475 = vmatpush1.msra.mxu0 %v439
    %476 = vmatprep.subr.mxu0 0.0
    %477 = vmatpush1.msra.mxu0 0.0
    %478 = vmatprep.subr.mxu0 0.0
    %479 = vmatpush1.msra.mxu0 0.0
    %480 = vmatprep.subr.mxu0 0.0
    %481 = vmatpush1.msra.mxu0 0.0
    %482 = vmatprep.subr.mxu0 0.0
    %483 = vmatpush1.msra.mxu0 0.0
    %484 = vmatprep.subr.mxu0 0.0
    %485 = vmatpush1.msra.mxu0 0.0
    %486 = vmatprep.subr.mxu0 0.0
    %487 = vmatpush1.msra.mxu0 0.0
    %488 = vmatprep.subr.mxu0 0.0
    %489 = vmatpush1.msra.mxu0 0.0
    %490 = vmatprep.subr.mxu0 0.0
    %491 = vmatpush1.msra.mxu0 0.0
    %492 = vmatprep.subr.mxu0 0.0
    %493 = vmatpush1.msra.mxu0 0.0
    %494 = vmatprep.subr.mxu0 0.0
    %495 = vmatpush1.msra.mxu0 0.0
    %496 = vmatprep.subr.mxu0 0.0
    %497 = vmatpush1.msra.mxu0 0.0
    %498 = vmatprep.subr.mxu0 0.0
    %499 = vmatpush1.msra.mxu0 0.0
    %500 = vmatprep.subr.mxu0 0.0
    %501 = vmatpush1.msra.mxu0 0.0
    %502 = vmatprep.subr.mxu0 0.0
    %503 = vmatpush1.msra.mxu0 0.0
    %504 = vmatprep.subr.mxu0 0.0
    %505 = vmatpush1.msra.mxu0 0.0
    %506 = vmatprep.subr.mxu0 0.0
    %507 = vmatpush1.msra.mxu0 0.0
    %508 = vmatprep.mubr.f32.mxu0 0.0
    %509 = vmatmul.mubr.f32.gmra.mrb[0].mxu0 0.0
    %v510 = vpop.f32.mrb[0].mxu0
    %v511 = vadd.f32 0.0, %v510
    %v512 = vpop.f32.mrb[0].mxu0
    %v513 = vadd.f32 0.0, %v512
    %514 = vdwg.mxu0
    %515 = vmatprep.subr.mxu0 %v382
    %516 = vmatpush1.msra.mxu0 %v381
    %517 = vmatprep.subr.mxu0 %v386
    %518 = vmatpush1.msra.mxu0 %v385
    %519 = vmatprep.subr.mxu0 %v390
    %520 = vmatpush1.msra.mxu0 %v389
    %521 = vmatprep.subr.mxu0 %v394
    %522 = vmatpush1.msra.mxu0 %v393
    %523 = vmatprep.subr.mxu0 %v398
    %524 = vmatpush1.msra.mxu0 %v397
    %525 = vmatprep.subr.mxu0 %v402
    %526 = vmatpush1.msra.mxu0 %v401
    %527 = vmatprep.subr.mxu0 %v406
    %528 = vmatpush1.msra.mxu0 %v405
    %529 = vmatprep.subr.mxu0 %v410
    %530 = vmatpush1.msra.mxu0 %v409
    %531 = vmatprep.subr.mxu0 %v414
    %532 = vmatpush1.msra.mxu0 %v413
    %533 = vmatprep.subr.mxu0 %v418
    %534 = vmatpush1.msra.mxu0 %v417
    %535 = vmatprep.subr.mxu0 %v422
    %536 = vmatpush1.msra.mxu0 %v421
    %537 = vmatprep.subr.mxu0 %v426
    %538 = vmatpush1.msra.mxu0 %v425
    %539 = vmatprep.subr.mxu0 %v430
    %540 = vmatpush1.msra.mxu0 %v429
    %541 = vmatprep.subr.mxu0 %v434
    %542 = vmatpush1.msra.mxu0 %v433
    %543 = vmatprep.subr.mxu0 %v438
    %544 = vmatpush1.msra.mxu0 %v437
    %545 = vmatprep.subr.mxu0 %v442
    %546 = vmatpush1.msra.mxu0 %v441
    %547 = vmatprep.subr.mxu0 0.0
    %548 = vmatpush1.msra.mxu0 0.0
    %549 = vmatprep.subr.mxu0 0.0
    %550 = vmatpush1.msra.mxu0 0.0
    %551 = vmatprep.subr.mxu0 0.0
    %552 = vmatpush1.msra.mxu0 0.0
    %553 = vmatprep.subr.mxu0 0.0
    %554 = vmatpush1.msra.mxu0 0.0
    %555 = vmatprep.subr.mxu0 0.0
    %556 = vmatpush1.msra.mxu0 0.0
    %557 = vmatprep.subr.mxu0 0.0
    %558 = vmatpush1.msra.mxu0 0.0
    %559 = vmatprep.subr.mxu0 0.0
    %560 = vmatpush1.msra.mxu0 0.0
    %561 = vmatprep.subr.mxu0 0.0
    %562 = vmatpush1.msra.mxu0 0.0
    %563 = vmatprep.subr.mxu0 0.0
    %564 = vmatpush1.msra.mxu0 0.0
    %565 = vmatprep.subr.mxu0 0.0
    %566 = vmatpush1.msra.mxu0 0.0
    %567 = vmatprep.subr.mxu0 0.0
    %568 = vmatpush1.msra.mxu0 0.0
    %569 = vmatprep.subr.mxu0 0.0
    %570 = vmatpush1.msra.mxu0 0.0
    %571 = vmatprep.subr.mxu0 0.0
    %572 = vmatpush1.msra.mxu0 0.0
    %573 = vmatprep.subr.mxu0 0.0
    %574 = vmatpush1.msra.mxu0 0.0
    %575 = vmatprep.subr.mxu0 0.0
    %576 = vmatpush1.msra.mxu0 0.0
    %577 = vmatprep.subr.mxu0 0.0
    %578 = vmatpush1.msra.mxu0 0.0
    %579 = vmatprep.mubr.f32.mxu0 0.0
    %580 = vmatmul.mubr.f32.gmra.mrb[0].mxu0 0.0
    %v581 = vpop.f32.mrb[0].mxu0
    %v582 = vadd.f32 0.0, %v581
    %v583 = vpop.f32.mrb[0].mxu0
    %v584 = vadd.f32 0.0, %v583
    %585 = vdwg.mxu0
    %v590 = vcombine.low %v511, %v513
    %v591 = vcombine.low %v582, %v584
    %v593 = vunpack.c.l.s4 1983009808
    %v594 = vunpack.c.0.s8 %v593
    %v595 = vlaneseq
    %v596 = vshrl.u32 %v595, 7
    %v597 = vsub.s32 %v594, %v596
    %v598 = vrot.slane %v590, %v597
    %v600 = vunpack.c.l.s4 1983009808
    %v601 = vunpack.c.0.s8 %v600
    %v602 = vlaneseq
    %v603 = vshrl.u32 %v602, 7
    %v604 = vsub.s32 %v601, %v603
    %v605 = vrot.slane %v591, %v604
    %v606 = vcombine.low %v598, %v605
    %v608 = vadd.f32 %v443, %v606
    %v609 = vmul.f32 %v608, 0.5
    %v610 = vtanh.pop %v609
    %v611 = vmul.f32 %v610, 0.5
    %v612 = vadd.f32 %v611, 0.5
    %v614 = vrot.slane %v608, 4
    %v616 = vtanh.pop %v614
    %v618 = vrot.slane %v612, 2
    %v620 = vmul.f32 %v618, 0.0
    %v621 = vmul.f32 %v612, %v616
    %v622 = vadd.f32 %v620, %v621
    %v623 = vrot.slane %v608, 6
    %v625 = vmul.f32 %v623, 0.5
    %v626 = vtanh.pop %v625
    %v627 = vmul.f32 %v626, 0.5
    %v628 = vadd.f32 %v627, 0.5
    %v629 = vtanh.pop %v622
    %v630 = vmul.f32 %v628, %v629
    %s631 = scalar_lea.vmem [#allocation2], 8
    %v632 = vld [vmem:[%s631] sm:$0xff]
    %633 = vmatprep.subr.mxu0 %v380
    %634 = vmatpush1.msra.mxu0 %v379
    %635 = vmatprep.subr.mxu0 %v384
    %636 = vmatpush1.msra.mxu0 %v383
    %637 = vmatprep.subr.mxu0 %v388
    %638 = vmatpush1.msra.mxu0 %v387
    %639 = vmatprep.subr.mxu0 %v392
    %640 = vmatpush1.msra.mxu0 %v391
    %641 = vmatprep.subr.mxu0 %v396
    %642 = vmatpush1.msra.mxu0 %v395
    %643 = vmatprep.subr.mxu0 %v400
    %644 = vmatpush1.msra.mxu0 %v399
    %645 = vmatprep.subr.mxu0 %v404
    %646 = vmatpush1.msra.mxu0 %v403
    %647 = vmatprep.subr.mxu0 %v408
    %648 = vmatpush1.msra.mxu0 %v407
    %649 = vmatprep.subr.mxu0 %v412
    %650 = vmatpush1.msra.mxu0 %v411
    %651 = vmatprep.subr.mxu0 %v416
    %652 = vmatpush1.msra.mxu0 %v415
    %653 = vmatprep.subr.mxu0 %v420
    %654 = vmatpush1.msra.mxu0 %v419
    %655 = vmatprep.subr.mxu0 %v424
    %656 = vmatpush1.msra.mxu0 %v423
    %657 = vmatprep.subr.mxu0 %v428
    %658 = vmatpush1.msra.mxu0 %v427
    %659 = vmatprep.subr.mxu0 %v432
    %660 = vmatpush1.msra.mxu0 %v431
    %661 = vmatprep.subr.mxu0 %v436
    %662 = vmatpush1.msra.mxu0 %v435
    %663 = vmatprep.subr.mxu0 %v440
    %664 = vmatpush1.msra.mxu0 %v439
    %665 = vmatprep.subr.mxu0 0.0
    %666 = vmatpush1.msra.mxu0 0.0
    %667 = vmatprep.subr.mxu0 0.0
    %668 = vmatpush1.msra.mxu0 0.0
    %669 = vmatprep.subr.mxu0 0.0
    %670 = vmatpush1.msra.mxu0 0.0
    %671 = vmatprep.subr.mxu0 0.0
    %672 = vmatpush1.msra.mxu0 0.0
    %673 = vmatprep.subr.mxu0 0.0
    %674 = vmatpush1.msra.mxu0 0.0
    %675 = vmatprep.subr.mxu0 0.0
    %676 = vmatpush1.msra.mxu0 0.0
    %677 = vmatprep.subr.mxu0 0.0
    %678 = vmatpush1.msra.mxu0 0.0
    %679 = vmatprep.subr.mxu0 0.0
    %680 = vmatpush1.msra.mxu0 0.0
    %681 = vmatprep.subr.mxu0 0.0
    %682 = vmatpush1.msra.mxu0 0.0
    %683 = vmatprep.subr.mxu0 0.0
    %684 = vmatpush1.msra.mxu0 0.0
    %685 = vmatprep.subr.mxu0 0.0
    %686 = vmatpush1.msra.mxu0 0.0
    %687 = vmatprep.subr.mxu0 0.0
    %688 = vmatpush1.msra.mxu0 0.0
    %689 = vmatprep.subr.mxu0 0.0
    %690 = vmatpush1.msra.mxu0 0.0
    %691 = vmatprep.subr.mxu0 0.0
    %692 = vmatpush1.msra.mxu0 0.0
    %693 = vmatprep.subr.mxu0 0.0
    %694 = vmatpush1.msra.mxu0 0.0
    %695 = vmatprep.subr.mxu0 0.0
    %696 = vmatpush1.msra.mxu0 0.0
    %697 = vmatprep.mubr.f32.mxu0 0.0
    %698 = vmatmul.mubr.f32.gmra.mrb[0].mxu0 %v630
    %v699 = vpop.f32.mrb[0].mxu0
    %v700 = vadd.f32 0.0, %v699
    %v701 = vpop.f32.mrb[0].mxu0
    %v702 = vadd.f32 0.0, %v701
    %703 = vdwg.mxu0
    %704 = vmatprep.subr.mxu0 %v382
    %705 = vmatpush1.msra.mxu0 %v381
    %706 = vmatprep.subr.mxu0 %v386
    %707 = vmatpush1.msra.mxu0 %v385
    %708 = vmatprep.subr.mxu0 %v390
    %709 = vmatpush1.msra.mxu0 %v389
    %710 = vmatprep.subr.mxu0 %v394
    %711 = vmatpush1.msra.mxu0 %v393
    %712 = vmatprep.subr.mxu0 %v398
    %713 = vmatpush1.msra.mxu0 %v397
    %714 = vmatprep.subr.mxu0 %v402
    %715 = vmatpush1.msra.mxu0 %v401
    %716 = vmatprep.subr.mxu0 %v406
    %717 = vmatpush1.msra.mxu0 %v405
    %718 = vmatprep.subr.mxu0 %v410
    %719 = vmatpush1.msra.mxu0 %v409
    %720 = vmatprep.subr.mxu0 %v414
    %721 = vmatpush1.msra.mxu0 %v413
    %722 = vmatprep.subr.mxu0 %v418
    %723 = vmatpush1.msra.mxu0 %v417
    %724 = vmatprep.subr.mxu0 %v422
    %725 = vmatpush1.msra.mxu0 %v421
    %726 = vmatprep.subr.mxu0 %v426
    %727 = vmatpush1.msra.mxu0 %v425
    %728 = vmatprep.subr.mxu0 %v430
    %729 = vmatpush1.msra.mxu0 %v429
    %730 = vmatprep.subr.mxu0 %v434
    %731 = vmatpush1.msra.mxu0 %v433
    %732 = vmatprep.subr.mxu0 %v438
    %733 = vmatpush1.msra.mxu0 %v437
    %734 = vmatprep.subr.mxu0 %v442
    %735 = vmatpush1.msra.mxu0 %v441
    %736 = vmatprep.subr.mxu0 0.0
    %737 = vmatpush1.msra.mxu0 0.0
    %738 = vmatprep.subr.mxu0 0.0
    %739 = vmatpush1.msra.mxu0 0.0
    %740 = vmatprep.subr.mxu0 0.0
    %741 = vmatpush1.msra.mxu0 0.0
    %742 = vmatprep.subr.mxu0 0.0
    %743 = vmatpush1.msra.mxu0 0.0
    %744 = vmatprep.subr.mxu0 0.0
    %745 = vmatpush1.msra.mxu0 0.0
    %746 = vmatprep.subr.mxu0 0.0
    %747 = vmatpush1.msra.mxu0 0.0
    %748 = vmatprep.subr.mxu0 0.0
    %749 = vmatpush1.msra.mxu0 0.0
    %750 = vmatprep.subr.mxu0 0.0
    %751 = vmatpush1.msra.mxu0 0.0
    %752 = vmatprep.subr.mxu0 0.0
    %753 = vmatpush1.msra.mxu0 0.0
    %754 = vmatprep.subr.mxu0 0.0
    %755 = vmatpush1.msra.mxu0 0.0
    %756 = vmatprep.subr.mxu0 0.0
    %757 = vmatpush1.msra.mxu0 0.0
    %758 = vmatprep.subr.mxu0 0.0
    %759 = vmatpush1.msra.mxu0 0.0
    %760 = vmatprep.subr.mxu0 0.0
    %761 = vmatpush1.msra.mxu0 0.0
    %762 = vmatprep.subr.mxu0 0.0
    %763 = vmatpush1.msra.mxu0 0.0
    %764 = vmatprep.subr.mxu0 0.0
    %765 = vmatpush1.msra.mxu0 0.0
    %766 = vmatprep.subr.mxu0 0.0
    %767 = vmatpush1.msra.mxu0 0.0
    %768 = vmatprep.mubr.f32.mxu0 0.0
    %769 = vmatmul.mubr.f32.gmra.mrb[0].mxu0 %v630
    %v770 = vpop.f32.mrb[0].mxu0
    %v771 = vadd.f32 0.0, %v770
    %v772 = vpop.f32.mrb[0].mxu0
    %v773 = vadd.f32 0.0, %v772
    %774 = vdwg.mxu0
    %v779 = vcombine.low %v700, %v702
    %v780 = vcombine.low %v771, %v773
    %v782 = vunpack.c.l.s4 1983009808
    %v783 = vunpack.c.0.s8 %v782
    %v784 = vlaneseq
    %v785 = vshrl.u32 %v784, 7
    %v786 = vsub.s32 %v783, %v785
    %v787 = vrot.slane %v779, %v786
    %v789 = vunpack.c.l.s4 1983009808
    %v790 = vunpack.c.0.s8 %v789
    %v791 = vlaneseq
    %v792 = vshrl.u32 %v791, 7
    %v793 = vsub.s32 %v790, %v792
    %v794 = vrot.slane %v780, %v793
    %v795 = vcombine.low %v787, %v794
    %v797 = vadd.f32 %v632, %v795
    %v798 = vmul.f32 %v797, 0.5
    %v799 = vtanh.pop %v798
    %v800 = vmul.f32 %v799, 0.5
    %v801 = vadd.f32 %v800, 0.5
    %v803 = vrot.slane %v797, 4
    %v805 = vtanh.pop %v803
    %v807 = vrot.slane %v801, 2
    %v809 = vmul.f32 %v807, %v622
    %v810 = vmul.f32 %v801, %v805
    %v811 = vadd.f32 %v809, %v810
    %v812 = vrot.slane %v797, 6
    %v814 = vmul.f32 %v812, 0.5
    %v815 = vtanh.pop %v814
    %v816 = vmul.f32 %v815, 0.5
    %v817 = vadd.f32 %v816, 0.5
    %v818 = vtanh.pop %v811
    %v819 = vmul.f32 %v817, %v818
    %s820 = scalar_lea.vmem [#allocation2], 16
    %v821 = vld [vmem:[%s820] sm:$0xff]
    %822 = vmatprep.subr.mxu0 %v380
    %823 = vmatpush1.msra.mxu0 %v379
    %824 = vmatprep.subr.mxu0 %v384
    %825 = vmatpush1.msra.mxu0 %v383
    %826 = vmatprep.subr.mxu0 %v388
    %827 = vmatpush1.msra.mxu0 %v387
    %828 = vmatprep.subr.mxu0 %v392
    %829 = vmatpush1.msra.mxu0 %v391
    %830 = vmatprep.subr.mxu0 %v396
    %831 = vmatpush1.msra.mxu0 %v395
    %832 = vmatprep.subr.mxu0 %v400
    %833 = vmatpush1.msra.mxu0 %v399
    %834 = vmatprep.subr.mxu0 %v404
    %835 = vmatpush1.msra.mxu0 %v403
    %836 = vmatprep.subr.mxu0 %v408
    %837 = vmatpush1.msra.mxu0 %v407
    %838 = vmatprep.subr.mxu0 %v412
    %839 = vmatpush1.msra.mxu0 %v411
    %840 = vmatprep.subr.mxu0 %v416
    %841 = vmatpush1.msra.mxu0 %v415
    %842 = vmatprep.subr.mxu0 %v420
    %843 = vmatpush1.msra.mxu0 %v419
    %844 = vmatprep.subr.mxu0 %v424
    %845 = vmatpush1.msra.mxu0 %v423
    %846 = vmatprep.subr.mxu0 %v428
    %847 = vmatpush1.msra.mxu0 %v427
    %848 = vmatprep.subr.mxu0 %v432
    %849 = vmatpush1.msra.mxu0 %v431
    %850 = vmatprep.subr.mxu0 %v436
    %851 = vmatpush1.msra.mxu0 %v435
    %852 = vmatprep.subr.mxu0 %v440
    %853 = vmatpush1.msra.mxu0 %v439
    %854 = vmatprep.subr.mxu0 0.0
    %855 = vmatpush1.msra.mxu0 0.0
    %856 = vmatprep.subr.mxu0 0.0
    %857 = vmatpush1.msra.mxu0 0.0
    %858 = vmatprep.subr.mxu0 0.0
    %859 = vmatpush1.msra.mxu0 0.0
    %860 = vmatprep.subr.mxu0 0.0
    %861 = vmatpush1.msra.mxu0 0.0
    %862 = vmatprep.subr.mxu0 0.0
    %863 = vmatpush1.msra.mxu0 0.0
    %864 = vmatprep.subr.mxu0 0.0
    %865 = vmatpush1.msra.mxu0 0.0
    %866 = vmatprep.subr.mxu0 0.0
    %867 = vmatpush1.msra.mxu0 0.0
    %868 = vmatprep.subr.mxu0 0.0
    %869 = vmatpush1.msra.mxu0 0.0
    %870 = vmatprep.subr.mxu0 0.0
    %871 = vmatpush1.msra.mxu0 0.0
    %872 = vmatprep.subr.mxu0 0.0
    %873 = vmatpush1.msra.mxu0 0.0
    %874 = vmatprep.subr.mxu0 0.0
    %875 = vmatpush1.msra.mxu0 0.0
    %876 = vmatprep.subr.mxu0 0.0
    %877 = vmatpush1.msra.mxu0 0.0
    %878 = vmatprep.subr.mxu0 0.0
    %879 = vmatpush1.msra.mxu0 0.0
    %880 = vmatprep.subr.mxu0 0.0
    %881 = vmatpush1.msra.mxu0 0.0
    %882 = vmatprep.subr.mxu0 0.0
    %883 = vmatpush1.msra.mxu0 0.0
    %884 = vmatprep.subr.mxu0 0.0
    %885 = vmatpush1.msra.mxu0 0.0
    %886 = vmatprep.mubr.f32.mxu0 0.0
    %887 = vmatmul.mubr.f32.gmra.mrb[0].mxu0 %v819
    %v888 = vpop.f32.mrb[0].mxu0
    %v889 = vadd.f32 0.0, %v888
    %v890 = vpop.f32.mrb[0].mxu0
    %v891 = vadd.f32 0.0, %v890
    %892 = vdwg.mxu0
    %893 = vmatprep.subr.mxu0 %v382
    %894 = vmatpush1.msra.mxu0 %v381
    %895 = vmatprep.subr.mxu0 %v386
    %896 = vmatpush1.msra.mxu0 %v385
    %897 = vmatprep.subr.mxu0 %v390
    %898 = vmatpush1.msra.mxu0 %v389
    %899 = vmatprep.subr.mxu0 %v394
    %900 = vmatpush1.msra.mxu0 %v393
    %901 = vmatprep.subr.mxu0 %v398
    %902 = vmatpush1.msra.mxu0 %v397
    %903 = vmatprep.subr.mxu0 %v402
    %904 = vmatpush1.msra.mxu0 %v401
    %905 = vmatprep.subr.mxu0 %v406
    %906 = vmatpush1.msra.mxu0 %v405
    %907 = vmatprep.subr.mxu0 %v410
    %908 = vmatpush1.msra.mxu0 %v409
    %909 = vmatprep.subr.mxu0 %v414
    %910 = vmatpush1.msra.mxu0 %v413
    %911 = vmatprep.subr.mxu0 %v418
    %912 = vmatpush1.msra.mxu0 %v417
    %913 = vmatprep.subr.mxu0 %v422
    %914 = vmatpush1.msra.mxu0 %v421
    %915 = vmatprep.subr.mxu0 %v426
    %916 = vmatpush1.msra.mxu0 %v425
    %917 = vmatprep.subr.mxu0 %v430
    %918 = vmatpush1.msra.mxu0 %v429
    %919 = vmatprep.subr.mxu0 %v434
    %920 = vmatpush1.msra.mxu0 %v433
    %921 = vmatprep.subr.mxu0 %v438
    %922 = vmatpush1.msra.mxu0 %v437
    %923 = vmatprep.subr.mxu0 %v442
    %924 = vmatpush1.msra.mxu0 %v441
    %925 = vmatprep.subr.mxu0 0.0
    %926 = vmatpush1.msra.mxu0 0.0
    %927 = vmatprep.subr.mxu0 0.0
    %928 = vmatpush1.msra.mxu0 0.0
    %929 = vmatprep.subr.mxu0 0.0
    %930 = vmatpush1.msra.mxu0 0.0
    %931 = vmatprep.subr.mxu0 0.0
    %932 = vmatpush1.msra.mxu0 0.0
    %933 = vmatprep.subr.mxu0 0.0
    %934 = vmatpush1.msra.mxu0 0.0
    %935 = vmatprep.subr.mxu0 0.0
    %936 = vmatpush1.msra.mxu0 0.0
    %937 = vmatprep.subr.mxu0 0.0
    %938 = vmatpush1.msra.mxu0 0.0
    %939 = vmatprep.subr.mxu0 0.0
    %940 = vmatpush1.msra.mxu0 0.0
    %941 = vmatprep.subr.mxu0 0.0
    %942 = vmatpush1.msra.mxu0 0.0
    %943 = vmatprep.subr.mxu0 0.0
    %944 = vmatpush1.msra.mxu0 0.0
    %945 = vmatprep.subr.mxu0 0.0
    %946 = vmatpush1.msra.mxu0 0.0
    %947 = vmatprep.subr.mxu0 0.0
    %948 = vmatpush1.msra.mxu0 0.0
    %949 = vmatprep.subr.mxu0 0.0
    %950 = vmatpush1.msra.mxu0 0.0
    %951 = vmatprep.subr.mxu0 0.0
    %952 = vmatpush1.msra.mxu0 0.0
    %953 = vmatprep.subr.mxu0 0.0
    %954 = vmatpush1.msra.mxu0 0.0
    %955 = vmatprep.subr.mxu0 0.0
    %956 = vmatpush1.msra.mxu0 0.0
    %957 = vmatprep.mubr.f32.mxu0 0.0
    %958 = vmatmul.mubr.f32.gmra.mrb[0].mxu0 %v819
    %v959 = vpop.f32.mrb[0].mxu0
    %v960 = vadd.f32 0.0, %v959
    %v961 = vpop.f32.mrb[0].mxu0
    %v962 = vadd.f32 0.0, %v961
    %963 = vdwg.mxu0
    %v968 = vcombine.low %v889, %v891
    %v969 = vcombine.low %v960, %v962
    %v971 = vunpack.c.l.s4 1983009808
    %v972 = vunpack.c.0.s8 %v971
    %v973 = vlaneseq
    %v974 = vshrl.u32 %v973, 7
    %v975 = vsub.s32 %v972, %v974
    %v976 = vrot.slane %v968, %v975
    %v978 = vunpack.c.l.s4 1983009808
    %v979 = vunpack.c.0.s8 %v978
    %v980 = vlaneseq
    %v981 = vshrl.u32 %v980, 7
    %v982 = vsub.s32 %v979, %v981
    %v983 = vrot.slane %v969, %v982
    %v984 = vcombine.low %v976, %v983
    %v986 = vadd.f32 %v821, %v984
    %v987 = vmul.f32 %v986, 0.5
    %v988 = vtanh.pop %v987
    %v989 = vmul.f32 %v988, 0.5
    %v990 = vadd.f32 %v989, 0.5
    %v992 = vrot.slane %v986, 4
    %v994 = vtanh.pop %v992
    %v996 = vrot.slane %v990, 2
    %v998 = vmul.f32 %v996, %v811
    %v999 = vmul.f32 %v990, %v994
    %v1000 = vadd.f32 %v998, %v999
    %v1001 = vrot.slane %v986, 6
    %v1003 = vmul.f32 %v1001, 0.5
    %v1004 = vtanh.pop %v1003
    %v1005 = vmul.f32 %v1004, 0.5
    %v1006 = vadd.f32 %v1005, 0.5
    %v1007 = vtanh.pop %v1000
    %v1008 = vmul.f32 %v1006, %v1007
    %s1009 = scalar_lea.vmem [#allocation2], 24
    %v1010 = vld [vmem:[%s1009] sm:$0xff]
    %1011 = vmatprep.subr.mxu0 %v380
    %1012 = vmatpush1.msra.mxu0 %v379
    %1013 = vmatprep.subr.mxu0 %v384
    %1014 = vmatpush1.msra.mxu0 %v383
    %1015 = vmatprep.subr.mxu0 %v388
    %1016 = vmatpush1.msra.mxu0 %v387
    %1017 = vmatprep.subr.mxu0 %v392
    %1018 = vmatpush1.msra.mxu0 %v391
    %1019 = vmatprep.subr.mxu0 %v396
    %1020 = vmatpush1.msra.mxu0 %v395
    %1021 = vmatprep.subr.mxu0 %v400
    %1022 = vmatpush1.msra.mxu0 %v399
    %1023 = vmatprep.subr.mxu0 %v404
    %1024 = vmatpush1.msra.mxu0 %v403
    %1025 = vmatprep.subr.mxu0 %v408
    %1026 = vmatpush1.msra.mxu0 %v407
    %1027 = vmatprep.subr.mxu0 %v412
    %1028 = vmatpush1.msra.mxu0 %v411
    %1029 = vmatprep.subr.mxu0 %v416
    %1030 = vmatpush1.msra.mxu0 %v415
    %1031 = vmatprep.subr.mxu0 %v420
    %1032 = vmatpush1.msra.mxu0 %v419
    %1033 = vmatprep.subr.mxu0 %v424
    %1034 = vmatpush1.msra.mxu0 %v423
    %1035 = vmatprep.subr.mxu0 %v428
    %1036 = vmatpush1.msra.mxu0 %v427
    %1037 = vmatprep.subr.mxu0 %v432
    %1038 = vmatpush1.msra.mxu0 %v431
    %1039 = vmatprep.subr.mxu0 %v436
    %1040 = vmatpush1.msra.mxu0 %v435
    %1041 = vmatprep.subr.mxu0 %v440
    %1042 = vmatpush1.msra.mxu0 %v439
    %1043 = vmatprep.subr.mxu0 0.0
    %1044 = vmatpush1.msra.mxu0 0.0
    %1045 = vmatprep.subr.mxu0 0.0
    %1046 = vmatpush1.msra.mxu0 0.0
    %1047 = vmatprep.subr.mxu0 0.0
    %1048 = vmatpush1.msra.mxu0 0.0
    %1049 = vmatprep.subr.mxu0 0.0
    %1050 = vmatpush1.msra.mxu0 0.0
    %1051 = vmatprep.subr.mxu0 0.0
    %1052 = vmatpush1.msra.mxu0 0.0
    %1053 = vmatprep.subr.mxu0 0.0
    %1054 = vmatpush1.msra.mxu0 0.0
    %1055 = vmatprep.subr.mxu0 0.0
    %1056 = vmatpush1.msra.mxu0 0.0
    %1057 = vmatprep.subr.mxu0 0.0
    %1058 = vmatpush1.msra.mxu0 0.0
    %1059 = vmatprep.subr.mxu0 0.0
    %1060 = vmatpush1.msra.mxu0 0.0
    %1061 = vmatprep.subr.mxu0 0.0
    %1062 = vmatpush1.msra.mxu0 0.0
    %1063 = vmatprep.subr.mxu0 0.0
    %1064 = vmatpush1.msra.mxu0 0.0
    %1065 = vmatprep.subr.mxu0 0.0
    %1066 = vmatpush1.msra.mxu0 0.0
    %1067 = vmatprep.subr.mxu0 0.0
    %1068 = vmatpush1.msra.mxu0 0.0
    %1069 = vmatprep.subr.mxu0 0.0
    %1070 = vmatpush1.msra.mxu0 0.0
    %1071 = vmatprep.subr.mxu0 0.0
    %1072 = vmatpush1.msra.mxu0 0.0
    %1073 = vmatprep.subr.mxu0 0.0
    %1074 = vmatpush1.msra.mxu0 0.0
    %1075 = vmatprep.mubr.f32.mxu0 0.0
    %1076 = vmatmul.mubr.f32.gmra.mrb[0].mxu0 %v1008
    %v1077 = vpop.f32.mrb[0].mxu0
    %v1078 = vadd.f32 0.0, %v1077
    %v1079 = vpop.f32.mrb[0].mxu0
    %v1080 = vadd.f32 0.0, %v1079
    %1081 = vdwg.mxu0
    %1082 = vmatprep.subr.mxu0 %v382
    %1083 = vmatpush1.msra.mxu0 %v381
    %1084 = vmatprep.subr.mxu0 %v386
    %1085 = vmatpush1.msra.mxu0 %v385
    %1086 = vmatprep.subr.mxu0 %v390
    %1087 = vmatpush1.msra.mxu0 %v389
    %1088 = vmatprep.subr.mxu0 %v394
    %1089 = vmatpush1.msra.mxu0 %v393
    %1090 = vmatprep.subr.mxu0 %v398
    %1091 = vmatpush1.msra.mxu0 %v397
    %1092 = vmatprep.subr.mxu0 %v402
    %1093 = vmatpush1.msra.mxu0 %v401
    %1094 = vmatprep.subr.mxu0 %v406
    %1095 = vmatpush1.msra.mxu0 %v405
    %1096 = vmatprep.subr.mxu0 %v410
    %1097 = vmatpush1.msra.mxu0 %v409
    %1098 = vmatprep.subr.mxu0 %v414
    %1099 = vmatpush1.msra.mxu0 %v413
    %1100 = vmatprep.subr.mxu0 %v418
    %1101 = vmatpush1.msra.mxu0 %v417
    %1102 = vmatprep.subr.mxu0 %v422
    %1103 = vmatpush1.msra.mxu0 %v421
    %1104 = vmatprep.subr.mxu0 %v426
    %1105 = vmatpush1.msra.mxu0 %v425
    %1106 = vmatprep.subr.mxu0 %v430
    %1107 = vmatpush1.msra.mxu0 %v429
    %1108 = vmatprep.subr.mxu0 %v434
    %1109 = vmatpush1.msra.mxu0 %v433
    %1110 = vmatprep.subr.mxu0 %v438
    %1111 = vmatpush1.msra.mxu0 %v437
    %1112 = vmatprep.subr.mxu0 %v442
    %1113 = vmatpush1.msra.mxu0 %v441
    %1114 = vmatprep.subr.mxu0 0.0
    %1115 = vmatpush1.msra.mxu0 0.0
    %1116 = vmatprep.subr.mxu0 0.0
    %1117 = vmatpush1.msra.mxu0 0.0
    %1118 = vmatprep.subr.mxu0 0.0
    %1119 = vmatpush1.msra.mxu0 0.0
    %1120 = vmatprep.subr.mxu0 0.0
    %1121 = vmatpush1.msra.mxu0 0.0
    %1122 = vmatprep.subr.mxu0 0.0
    %1123 = vmatpush1.msra.mxu0 0.0
    %1124 = vmatprep.subr.mxu0 0.0
    %1125 = vmatpush1.msra.mxu0 0.0
    %1126 = vmatprep.subr.mxu0 0.0
    %1127 = vmatpush1.msra.mxu0 0.0
    %1128 = vmatprep.subr.mxu0 0.0
    %1129 = vmatpush1.msra.mxu0 0.0
    %1130 = vmatprep.subr.mxu0 0.0
    %1131 = vmatpush1.msra.mxu0 0.0
    %1132 = vmatprep.subr.mxu0 0.0
    %1133 = vmatpush1.msra.mxu0 0.0
    %1134 = vmatprep.subr.mxu0 0.0
    %1135 = vmatpush1.msra.mxu0 0.0
    %1136 = vmatprep.subr.mxu0 0.0
    %1137 = vmatpush1.msra.mxu0 0.0
    %1138 = vmatprep.subr.mxu0 0.0
    %1139 = vmatpush1.msra.mxu0 0.0
    %1140 = vmatprep.subr.mxu0 0.0
    %1141 = vmatpush1.msra.mxu0 0.0
    %1142 = vmatprep.subr.mxu0 0.0
    %1143 = vmatpush1.msra.mxu0 0.0
    %1144 = vmatprep.subr.mxu0 0.0
    %1145 = vmatpush1.msra.mxu0 0.0
    %1146 = vmatprep.mubr.f32.mxu0 0.0
    %1147 = vmatmul.mubr.f32.gmra.mrb[0].mxu0 %v1008
    %v1148 = vpop.f32.mrb[0].mxu0
    %v1149 = vadd.f32 0.0, %v1148
    %v1150 = vpop.f32.mrb[0].mxu0
    %v1151 = vadd.f32 0.0, %v1150
    %1152 = vdwg.mxu0
    %v1157 = vcombine.low %v1078, %v1080
    %v1158 = vcombine.low %v1149, %v1151
    %v1160 = vunpack.c.l.s4 1983009808
    %v1161 = vunpack.c.0.s8 %v1160
    %v1162 = vlaneseq
    %v1163 = vshrl.u32 %v1162, 7
    %v1164 = vsub.s32 %v1161, %v1163
    %v1165 = vrot.slane %v1157, %v1164
    %v1167 = vunpack.c.l.s4 1983009808
    %v1168 = vunpack.c.0.s8 %v1167
    %v1169 = vlaneseq
    %v1170 = vshrl.u32 %v1169, 7
    %v1171 = vsub.s32 %v1168, %v1170
    %v1172 = vrot.slane %v1158, %v1171
    %v1173 = vcombine.low %v1165, %v1172
    %v1175 = vadd.f32 %v1010, %v1173
    %v1176 = vmul.f32 %v1175, 0.5
    %v1177 = vtanh.pop %v1176
    %v1178 = vmul.f32 %v1177, 0.5
    %v1179 = vadd.f32 %v1178, 0.5
    %v1181 = vrot.slane %v1175, 4
    %v1183 = vtanh.pop %v1181
    %v1185 = vrot.slane %v1179, 2
    %v1187 = vmul.f32 %v1185, %v1000
    %v1188 = vmul.f32 %v1179, %v1183
    %v1189 = vadd.f32 %v1187, %v1188
    %v1190 = vrot.slane %v1175, 6
    %v1192 = vmul.f32 %v1190, 0.5
    %v1193 = vtanh.pop %v1192
    %v1194 = vmul.f32 %v1193, 0.5
    %v1195 = vadd.f32 %v1194, 0.5
    %v1196 = vtanh.pop %v1189
    %v1197 = vmul.f32 %v1195, %v1196
    %s1198 = scalar_lea.vmem [#allocation2], 32
    %v1199 = vld [vmem:[%s1198] sm:$0xff]
    %1200 = vmatprep.subr.mxu0 %v380
    %1201 = vmatpush1.msra.mxu0 %v379
    %1202 = vmatprep.subr.mxu0 %v384
    %1203 = vmatpush1.msra.mxu0 %v383
    %1204 = vmatprep.subr.mxu0 %v388
    %1205 = vmatpush1.msra.mxu0 %v387
    %1206 = vmatprep.subr.mxu0 %v392
    %1207 = vmatpush1.msra.mxu0 %v391
    %1208 = vmatprep.subr.mxu0 %v396
    %1209 = vmatpush1.msra.mxu0 %v395
    %1210 = vmatprep.subr.mxu0 %v400
    %1211 = vmatpush1.msra.mxu0 %v399
    %1212 = vmatprep.subr.mxu0 %v404
    %1213 = vmatpush1.msra.mxu0 %v403
    %1214 = vmatprep.subr.mxu0 %v408
    %1215 = vmatpush1.msra.mxu0 %v407
    %1216 = vmatprep.subr.mxu0 %v412
    %1217 = vmatpush1.msra.mxu0 %v411
    %1218 = vmatprep.subr.mxu0 %v416
    %1219 = vmatpush1.msra.mxu0 %v415
    %1220 = vmatprep.subr.mxu0 %v420
    %1221 = vmatpush1.msra.mxu0 %v419
    %1222 = vmatprep.subr.mxu0 %v424
    %1223 = vmatpush1.msra.mxu0 %v423
    %1224 = vmatprep.subr.mxu0 %v428
    %1225 = vmatpush1.msra.mxu0 %v427
    %1226 = vmatprep.subr.mxu0 %v432
    %1227 = vmatpush1.msra.mxu0 %v431
    %1228 = vmatprep.subr.mxu0 %v436
    %1229 = vmatpush1.msra.mxu0 %v435
    %1230 = vmatprep.subr.mxu0 %v440
    %1231 = vmatpush1.msra.mxu0 %v439
    %1232 = vmatprep.subr.mxu0 0.0
    %1233 = vmatpush1.msra.mxu0 0.0
    %1234 = vmatprep.subr.mxu0 0.0
    %1235 = vmatpush1.msra.mxu0 0.0
    %1236 = vmatprep.subr.mxu0 0.0
    %1237 = vmatpush1.msra.mxu0 0.0
    %1238 = vmatprep.subr.mxu0 0.0
    %1239 = vmatpush1.msra.mxu0 0.0
    %1240 = vmatprep.subr.mxu0 0.0
    %1241 = vmatpush1.msra.mxu0 0.0
    %1242 = vmatprep.subr.mxu0 0.0
    %1243 = vmatpush1.msra.mxu0 0.0
    %1244 = vmatprep.subr.mxu0 0.0
    %1245 = vmatpush1.msra.mxu0 0.0
    %1246 = vmatprep.subr.mxu0 0.0
    %1247 = vmatpush1.msra.mxu0 0.0
    %1248 = vmatprep.subr.mxu0 0.0
    %1249 = vmatpush1.msra.mxu0 0.0
    %1250 = vmatprep.subr.mxu0 0.0
    %1251 = vmatpush1.msra.mxu0 0.0
    %1252 = vmatprep.subr.mxu0 0.0
    %1253 = vmatpush1.msra.mxu0 0.0
    %1254 = vmatprep.subr.mxu0 0.0
    %1255 = vmatpush1.msra.mxu0 0.0
    %1256 = vmatprep.subr.mxu0 0.0
    %1257 = vmatpush1.msra.mxu0 0.0
    %1258 = vmatprep.subr.mxu0 0.0
    %1259 = vmatpush1.msra.mxu0 0.0
    %1260 = vmatprep.subr.mxu0 0.0
    %1261 = vmatpush1.msra.mxu0 0.0
    %1262 = vmatprep.subr.mxu0 0.0
    %1263 = vmatpush1.msra.mxu0 0.0
    %1264 = vmatprep.mubr.f32.mxu0 0.0
    %1265 = vmatmul.mubr.f32.gmra.mrb[0].mxu0 %v1197
    %v1266 = vpop.f32.mrb[0].mxu0
    %v1267 = vadd.f32 0.0, %v1266
    %v1268 = vpop.f32.mrb[0].mxu0
    %v1269 = vadd.f32 0.0, %v1268
    %1270 = vdwg.mxu0
    %1271 = vmatprep.subr.mxu0 %v382
    %1272 = vmatpush1.msra.mxu0 %v381
    %1273 = vmatprep.subr.mxu0 %v386
    %1274 = vmatpush1.msra.mxu0 %v385
    %1275 = vmatprep.subr.mxu0 %v390
    %1276 = vmatpush1.msra.mxu0 %v389
    %1277 = vmatprep.subr.mxu0 %v394
    %1278 = vmatpush1.msra.mxu0 %v393
    %1279 = vmatprep.subr.mxu0 %v398
    %1280 = vmatpush1.msra.mxu0 %v397
    %1281 = vmatprep.subr.mxu0 %v402
    %1282 = vmatpush1.msra.mxu0 %v401
    %1283 = vmatprep.subr.mxu0 %v406
    %1284 = vmatpush1.msra.mxu0 %v405
    %1285 = vmatprep.subr.mxu0 %v410
    %1286 = vmatpush1.msra.mxu0 %v409
    %1287 = vmatprep.subr.mxu0 %v414
    %1288 = vmatpush1.msra.mxu0 %v413
    %1289 = vmatprep.subr.mxu0 %v418
    %1290 = vmatpush1.msra.mxu0 %v417
    %1291 = vmatprep.subr.mxu0 %v422
    %1292 = vmatpush1.msra.mxu0 %v421
    %1293 = vmatprep.subr.mxu0 %v426
    %1294 = vmatpush1.msra.mxu0 %v425
    %1295 = vmatprep.subr.mxu0 %v430
    %1296 = vmatpush1.msra.mxu0 %v429
    %1297 = vmatprep.subr.mxu0 %v434
    %1298 = vmatpush1.msra.mxu0 %v433
    %1299 = vmatprep.subr.mxu0 %v438
    %1300 = vmatpush1.msra.mxu0 %v437
    %1301 = vmatprep.subr.mxu0 %v442
    %1302 = vmatpush1.msra.mxu0 %v441
    %1303 = vmatprep.subr.mxu0 0.0
    %1304 = vmatpush1.msra.mxu0 0.0
    %1305 = vmatprep.subr.mxu0 0.0
    %1306 = vmatpush1.msra.mxu0 0.0
    %1307 = vmatprep.subr.mxu0 0.0
    %1308 = vmatpush1.msra.mxu0 0.0
    %1309 = vmatprep.subr.mxu0 0.0
    %1310 = vmatpush1.msra.mxu0 0.0
    %1311 = vmatprep.subr.mxu0 0.0
    %1312 = vmatpush1.msra.mxu0 0.0
    %1313 = vmatprep.subr.mxu0 0.0
    %1314 = vmatpush1.msra.mxu0 0.0
    %1315 = vmatprep.subr.mxu0 0.0
    %1316 = vmatpush1.msra.mxu0 0.0
    %1317 = vmatprep.subr.mxu0 0.0
    %1318 = vmatpush1.msra.mxu0 0.0
    %1319 = vmatprep.subr.mxu0 0.0
    %1320 = vmatpush1.msra.mxu0 0.0
    %1321 = vmatprep.subr.mxu0 0.0
    %1322 = vmatpush1.msra.mxu0 0.0
    %1323 = vmatprep.subr.mxu0 0.0
    %1324 = vmatpush1.msra.mxu0 0.0
    %1325 = vmatprep.subr.mxu0 0.0
    %1326 = vmatpush1.msra.mxu0 0.0
    %1327 = vmatprep.subr.mxu0 0.0
    %1328 = vmatpush1.msra.mxu0 0.0
    %1329 = vmatprep.subr.mxu0 0.0
    %1330 = vmatpush1.msra.mxu0 0.0
    %1331 = vmatprep.subr.mxu0 0.0
    %1332 = vmatpush1.msra.mxu0 0.0
    %1333 = vmatprep.subr.mxu0 0.0
    %1334 = vmatpush1.msra.mxu0 0.0
    %1335 = vmatprep.mubr.f32.mxu0 0.0
    %1336 = vmatmul.mubr.f32.gmra.mrb[0].mxu0 %v1197
    %v1337 = vpop.f32.mrb[0].mxu0
    %v1338 = vadd.f32 0.0, %v1337
    %v1339 = vpop.f32.mrb[0].mxu0
    %v1340 = vadd.f32 0.0, %v1339
    %1341 = vdwg.mxu0
    %v1346 = vcombine.low %v1267, %v1269
    %v1347 = vcombine.low %v1338, %v1340
    %v1349 = vunpack.c.l.s4 1983009808
    %v1350 = vunpack.c.0.s8 %v1349
    %v1351 = vlaneseq
    %v1352 = vshrl.u32 %v1351, 7
    %v1353 = vsub.s32 %v1350, %v1352
    %v1354 = vrot.slane %v1346, %v1353
    %v1356 = vunpack.c.l.s4 1983009808
    %v1357 = vunpack.c.0.s8 %v1356
    %v1358 = vlaneseq
    %v1359 = vshrl.u32 %v1358, 7
    %v1360 = vsub.s32 %v1357, %v1359
    %v1361 = vrot.slane %v1347, %v1360
    %v1362 = vcombine.low %v1354, %v1361
    %v1364 = vadd.f32 %v1199, %v1362
    %v1365 = vmul.f32 %v1364, 0.5
    %v1366 = vtanh.pop %v1365
    %v1367 = vmul.f32 %v1366, 0.5
    %v1368 = vadd.f32 %v1367, 0.5
    %v1370 = vrot.slane %v1364, 4
    %v1372 = vtanh.pop %v1370
    %v1374 = vrot.slane %v1368, 2
    %v1376 = vmul.f32 %v1374, %v1189
    %v1377 = vmul.f32 %v1368, %v1372
    %v1378 = vadd.f32 %v1376, %v1377
    %v1379 = vrot.slane %v1364, 6
    %v1381 = vmul.f32 %v1379, 0.5
    %v1382 = vtanh.pop %v1381
    %v1383 = vmul.f32 %v1382, 0.5
    %v1384 = vadd.f32 %v1383, 0.5
    %v1385 = vtanh.pop %v1378
    %v1386 = vmul.f32 %v1384, %v1385
    %s1387 = scalar_lea.vmem [#allocation2], 40
    %v1388 = vld [vmem:[%s1387] sm:$0xff]
    %1389 = vmatprep.subr.mxu0 %v380
    %1390 = vmatpush1.msra.mxu0 %v379
    %1391 = vmatprep.subr.mxu0 %v384
    %1392 = vmatpush1.msra.mxu0 %v383
    %1393 = vmatprep.subr.mxu0 %v388
    %1394 = vmatpush1.msra.mxu0 %v387
    %1395 = vmatprep.subr.mxu0 %v392
    %1396 = vmatpush1.msra.mxu0 %v391
    %1397 = vmatprep.subr.mxu0 %v396
    %1398 = vmatpush1.msra.mxu0 %v395
    %1399 = vmatprep.subr.mxu0 %v400
    %1400 = vmatpush1.msra.mxu0 %v399
    %1401 = vmatprep.subr.mxu0 %v404
    %1402 = vmatpush1.msra.mxu0 %v403
    %1403 = vmatprep.subr.mxu0 %v408
    %1404 = vmatpush1.msra.mxu0 %v407
    %1405 = vmatprep.subr.mxu0 %v412
    %1406 = vmatpush1.msra.mxu0 %v411
    %1407 = vmatprep.subr.mxu0 %v416
    %1408 = vmatpush1.msra.mxu0 %v415
    %1409 = vmatprep.subr.mxu0 %v420
    %1410 = vmatpush1.msra.mxu0 %v419
    %1411 = vmatprep.subr.mxu0 %v424
    %1412 = vmatpush1.msra.mxu0 %v423
    %1413 = vmatprep.subr.mxu0 %v428
    %1414 = vmatpush1.msra.mxu0 %v427
    %1415 = vmatprep.subr.mxu0 %v432
    %1416 = vmatpush1.msra.mxu0 %v431
    %1417 = vmatprep.subr.mxu0 %v436
    %1418 = vmatpush1.msra.mxu0 %v435
    %1419 = vmatprep.subr.mxu0 %v440
    %1420 = vmatpush1.msra.mxu0 %v439
    %1421 = vmatprep.subr.mxu0 0.0
    %1422 = vmatpush1.msra.mxu0 0.0
    %1423 = vmatprep.subr.mxu0 0.0
    %1424 = vmatpush1.msra.mxu0 0.0
    %1425 = vmatprep.subr.mxu0 0.0
    %1426 = vmatpush1.msra.mxu0 0.0
    %1427 = vmatprep.subr.mxu0 0.0
    %1428 = vmatpush1.msra.mxu0 0.0
    %1429 = vmatprep.subr.mxu0 0.0
    %1430 = vmatpush1.msra.mxu0 0.0
    %1431 = vmatprep.subr.mxu0 0.0
    %1432 = vmatpush1.msra.mxu0 0.0
    %1433 = vmatprep.subr.mxu0 0.0
    %1434 = vmatpush1.msra.mxu0 0.0
    %1435 = vmatprep.subr.mxu0 0.0
    %1436 = vmatpush1.msra.mxu0 0.0
    %1437 = vmatprep.subr.mxu0 0.0
    %1438 = vmatpush1.msra.mxu0 0.0
    %1439 = vmatprep.subr.mxu0 0.0
    %1440 = vmatpush1.msra.mxu0 0.0
    %1441 = vmatprep.subr.mxu0 0.0
    %1442 = vmatpush1.msra.mxu0 0.0
    %1443 = vmatprep.subr.mxu0 0.0
    %1444 = vmatpush1.msra.mxu0 0.0
    %1445 = vmatprep.subr.mxu0 0.0
    %1446 = vmatpush1.msra.mxu0 0.0
    %1447 = vmatprep.subr.mxu0 0.0
    %1448 = vmatpush1.msra.mxu0 0.0
    %1449 = vmatprep.subr.mxu0 0.0
    %1450 = vmatpush1.msra.mxu0 0.0
    %1451 = vmatprep.subr.mxu0 0.0
    %1452 = vmatpush1.msra.mxu0 0.0
    %1453 = vmatprep.mubr.f32.mxu0 0.0
    %1454 = vmatmul.mubr.f32.gmra.mrb[0].mxu0 %v1386
    %v1455 = vpop.f32.mrb[0].mxu0
    %v1456 = vadd.f32 0.0, %v1455
    %v1457 = vpop.f32.mrb[0].mxu0
    %v1458 = vadd.f32 0.0, %v1457
    %1459 = vdwg.mxu0
    %1460 = vmatprep.subr.mxu0 %v382
    %1461 = vmatpush1.msra.mxu0 %v381
    %1462 = vmatprep.subr.mxu0 %v386
    %1463 = vmatpush1.msra.mxu0 %v385
    %1464 = vmatprep.subr.mxu0 %v390
    %1465 = vmatpush1.msra.mxu0 %v389
    %1466 = vmatprep.subr.mxu0 %v394
    %1467 = vmatpush1.msra.mxu0 %v393
    %1468 = vmatprep.subr.mxu0 %v398
    %1469 = vmatpush1.msra.mxu0 %v397
    %1470 = vmatprep.subr.mxu0 %v402
    %1471 = vmatpush1.msra.mxu0 %v401
    %1472 = vmatprep.subr.mxu0 %v406
    %1473 = vmatpush1.msra.mxu0 %v405
    %1474 = vmatprep.subr.mxu0 %v410
    %1475 = vmatpush1.msra.mxu0 %v409
    %1476 = vmatprep.subr.mxu0 %v414
    %1477 = vmatpush1.msra.mxu0 %v413
    %1478 = vmatprep.subr.mxu0 %v418
    %1479 = vmatpush1.msra.mxu0 %v417
    %1480 = vmatprep.subr.mxu0 %v422
    %1481 = vmatpush1.msra.mxu0 %v421
    %1482 = vmatprep.subr.mxu0 %v426
    %1483 = vmatpush1.msra.mxu0 %v425
    %1484 = vmatprep.subr.mxu0 %v430
    %1485 = vmatpush1.msra.mxu0 %v429
    %1486 = vmatprep.subr.mxu0 %v434
    %1487 = vmatpush1.msra.mxu0 %v433
    %1488 = vmatprep.subr.mxu0 %v438
    %1489 = vmatpush1.msra.mxu0 %v437
    %1490 = vmatprep.subr.mxu0 %v442
    %1491 = vmatpush1.msra.mxu0 %v441
    %1492 = vmatprep.subr.mxu0 0.0
    %1493 = vmatpush1.msra.mxu0 0.0
    %1494 = vmatprep.subr.mxu0 0.0
    %1495 = vmatpush1.msra.mxu0 0.0
    %1496 = vmatprep.subr.mxu0 0.0
    %1497 = vmatpush1.msra.mxu0 0.0
    %1498 = vmatprep.subr.mxu0 0.0
    %1499 = vmatpush1.msra.mxu0 0.0
    %1500 = vmatprep.subr.mxu0 0.0
    %1501 = vmatpush1.msra.mxu0 0.0
    %1502 = vmatprep.subr.mxu0 0.0
    %1503 = vmatpush1.msra.mxu0 0.0
    %1504 = vmatprep.subr.mxu0 0.0
    %1505 = vmatpush1.msra.mxu0 0.0
    %1506 = vmatprep.subr.mxu0 0.0
    %1507 = vmatpush1.msra.mxu0 0.0
    %1508 = vmatprep.subr.mxu0 0.0
    %1509 = vmatpush1.msra.mxu0 0.0
    %1510 = vmatprep.subr.mxu0 0.0
    %1511 = vmatpush1.msra.mxu0 0.0
    %1512 = vmatprep.subr.mxu0 0.0
    %1513 = vmatpush1.msra.mxu0 0.0
    %1514 = vmatprep.subr.mxu0 0.0
    %1515 = vmatpush1.msra.mxu0 0.0
    %1516 = vmatprep.subr.mxu0 0.0
    %1517 = vmatpush1.msra.mxu0 0.0
    %1518 = vmatprep.subr.mxu0 0.0
    %1519 = vmatpush1.msra.mxu0 0.0
    %1520 = vmatprep.subr.mxu0 0.0
    %1521 = vmatpush1.msra.mxu0 0.0
    %1522 = vmatprep.subr.mxu0 0.0
    %1523 = vmatpush1.msra.mxu0 0.0
    %1524 = vmatprep.mubr.f32.mxu0 0.0
    %1525 = vmatmul.mubr.f32.gmra.mrb[0].mxu0 %v1386
    %v1526 = vpop.f32.mrb[0].mxu0
    %v1527 = vadd.f32 0.0, %v1526
    %v1528 = vpop.f32.mrb[0].mxu0
    %v1529 = vadd.f32 0.0, %v1528
    %1530 = vdwg.mxu0
    %v1535 = vcombine.low %v1456, %v1458
    %v1536 = vcombine.low %v1527, %v1529
    %v1538 = vunpack.c.l.s4 1983009808
    %v1539 = vunpack.c.0.s8 %v1538
    %v1540 = vlaneseq
    %v1541 = vshrl.u32 %v1540, 7
    %v1542 = vsub.s32 %v1539, %v1541
    %v1543 = vrot.slane %v1535, %v1542
    %v1545 = vunpack.c.l.s4 1983009808
    %v1546 = vunpack.c.0.s8 %v1545
    %v1547 = vlaneseq
    %v1548 = vshrl.u32 %v1547, 7
    %v1549 = vsub.s32 %v1546, %v1548
    %v1550 = vrot.slane %v1536, %v1549
    %v1551 = vcombine.low %v1543, %v1550
    %v1553 = vadd.f32 %v1388, %v1551
    %v1554 = vmul.f32 %v1553, 0.5
    %v1555 = vtanh.pop %v1554
    %v1556 = vmul.f32 %v1555, 0.5
    %v1557 = vadd.f32 %v1556, 0.5
    %v1559 = vrot.slane %v1553, 4
    %v1561 = vtanh.pop %v1559
    %v1563 = vrot.slane %v1557, 2
    %v1565 = vmul.f32 %v1563, %v1378
    %v1566 = vmul.f32 %v1557, %v1561
    %v1567 = vadd.f32 %v1565, %v1566
    %v1568 = vrot.slane %v1553, 6
    %v1570 = vmul.f32 %v1568, 0.5
    %v1571 = vtanh.pop %v1570
    %v1572 = vmul.f32 %v1571, 0.5
    %v1573 = vadd.f32 %v1572, 0.5
    %v1574 = vtanh.pop %v1567
    %v1575 = vmul.f32 %v1573, %v1574
    %s1576 = scalar_lea.vmem [#allocation2], 48
    %v1577 = vld [vmem:[%s1576] sm:$0xff]
    %1578 = vmatprep.subr.mxu0 %v380
    %1579 = vmatpush1.msra.mxu0 %v379
    %1580 = vmatprep.subr.mxu0 %v384
    %1581 = vmatpush1.msra.mxu0 %v383
    %1582 = vmatprep.subr.mxu0 %v388
    %1583 = vmatpush1.msra.mxu0 %v387
    %1584 = vmatprep.subr.mxu0 %v392
    %1585 = vmatpush1.msra.mxu0 %v391
    %1586 = vmatprep.subr.mxu0 %v396
    %1587 = vmatpush1.msra.mxu0 %v395
    %1588 = vmatprep.subr.mxu0 %v400
    %1589 = vmatpush1.msra.mxu0 %v399
    %1590 = vmatprep.subr.mxu0 %v404
    %1591 = vmatpush1.msra.mxu0 %v403
    %1592 = vmatprep.subr.mxu0 %v408
    %1593 = vmatpush1.msra.mxu0 %v407
    %1594 = vmatprep.subr.mxu0 %v412
    %1595 = vmatpush1.msra.mxu0 %v411
    %1596 = vmatprep.subr.mxu0 %v416
    %1597 = vmatpush1.msra.mxu0 %v415
    %1598 = vmatprep.subr.mxu0 %v420
    %1599 = vmatpush1.msra.mxu0 %v419
    %1600 = vmatprep.subr.mxu0 %v424
    %1601 = vmatpush1.msra.mxu0 %v423
    %1602 = vmatprep.subr.mxu0 %v428
    %1603 = vmatpush1.msra.mxu0 %v427
    %1604 = vmatprep.subr.mxu0 %v432
    %1605 = vmatpush1.msra.mxu0 %v431
    %1606 = vmatprep.subr.mxu0 %v436
    %1607 = vmatpush1.msra.mxu0 %v435
    %1608 = vmatprep.subr.mxu0 %v440
    %1609 = vmatpush1.msra.mxu0 %v439
    %1610 = vmatprep.subr.mxu0 0.0
    %1611 = vmatpush1.msra.mxu0 0.0
    %1612 = vmatprep.subr.mxu0 0.0
    %1613 = vmatpush1.msra.mxu0 0.0
    %1614 = vmatprep.subr.mxu0 0.0
    %1615 = vmatpush1.msra.mxu0 0.0
    %1616 = vmatprep.subr.mxu0 0.0
    %1617 = vmatpush1.msra.mxu0 0.0
    %1618 = vmatprep.subr.mxu0 0.0
    %1619 = vmatpush1.msra.mxu0 0.0
    %1620 = vmatprep.subr.mxu0 0.0
    %1621 = vmatpush1.msra.mxu0 0.0
    %1622 = vmatprep.subr.mxu0 0.0
    %1623 = vmatpush1.msra.mxu0 0.0
    %1624 = vmatprep.subr.mxu0 0.0
    %1625 = vmatpush1.msra.mxu0 0.0
    %1626 = vmatprep.subr.mxu0 0.0
    %1627 = vmatpush1.msra.mxu0 0.0
    %1628 = vmatprep.subr.mxu0 0.0
    %1629 = vmatpush1.msra.mxu0 0.0
    %1630 = vmatprep.subr.mxu0 0.0
    %1631 = vmatpush1.msra.mxu0 0.0
    %1632 = vmatprep.subr.mxu0 0.0
    %1633 = vmatpush1.msra.mxu0 0.0
    %1634 = vmatprep.subr.mxu0 0.0
    %1635 = vmatpush1.msra.mxu0 0.0
    %1636 = vmatprep.subr.mxu0 0.0
    %1637 = vmatpush1.msra.mxu0 0.0
    %1638 = vmatprep.subr.mxu0 0.0
    %1639 = vmatpush1.msra.mxu0 0.0
    %1640 = vmatprep.subr.mxu0 0.0
    %1641 = vmatpush1.msra.mxu0 0.0
    %1642 = vmatprep.mubr.f32.mxu0 0.0
    %1643 = vmatmul.mubr.f32.gmra.mrb[0].mxu0 %v1575
    %v1644 = vpop.f32.mrb[0].mxu0
    %v1645 = vadd.f32 0.0, %v1644
    %v1646 = vpop.f32.mrb[0].mxu0
    %v1647 = vadd.f32 0.0, %v1646
    %1648 = vdwg.mxu0
    %1649 = vmatprep.subr.mxu0 %v382
    %1650 = vmatpush1.msra.mxu0 %v381
    %1651 = vmatprep.subr.mxu0 %v386
    %1652 = vmatpush1.msra.mxu0 %v385
    %1653 = vmatprep.subr.mxu0 %v390
    %1654 = vmatpush1.msra.mxu0 %v389
    %1655 = vmatprep.subr.mxu0 %v394
    %1656 = vmatpush1.msra.mxu0 %v393
    %1657 = vmatprep.subr.mxu0 %v398
    %1658 = vmatpush1.msra.mxu0 %v397
    %1659 = vmatprep.subr.mxu0 %v402
    %1660 = vmatpush1.msra.mxu0 %v401
    %1661 = vmatprep.subr.mxu0 %v406
    %1662 = vmatpush1.msra.mxu0 %v405
    %1663 = vmatprep.subr.mxu0 %v410
    %1664 = vmatpush1.msra.mxu0 %v409
    %1665 = vmatprep.subr.mxu0 %v414
    %1666 = vmatpush1.msra.mxu0 %v413
    %1667 = vmatprep.subr.mxu0 %v418
    %1668 = vmatpush1.msra.mxu0 %v417
    %1669 = vmatprep.subr.mxu0 %v422
    %1670 = vmatpush1.msra.mxu0 %v421
    %1671 = vmatprep.subr.mxu0 %v426
    %1672 = vmatpush1.msra.mxu0 %v425
    %1673 = vmatprep.subr.mxu0 %v430
    %1674 = vmatpush1.msra.mxu0 %v429
    %1675 = vmatprep.subr.mxu0 %v434
    %1676 = vmatpush1.msra.mxu0 %v433
    %1677 = vmatprep.subr.mxu0 %v438
    %1678 = vmatpush1.msra.mxu0 %v437
    %1679 = vmatprep.subr.mxu0 %v442
    %1680 = vmatpush1.msra.mxu0 %v441
    %1681 = vmatprep.subr.mxu0 0.0
    %1682 = vmatpush1.msra.mxu0 0.0
    %1683 = vmatprep.subr.mxu0 0.0
    %1684 = vmatpush1.msra.mxu0 0.0
    %1685 = vmatprep.subr.mxu0 0.0
    %1686 = vmatpush1.msra.mxu0 0.0
    %1687 = vmatprep.subr.mxu0 0.0
    %1688 = vmatpush1.msra.mxu0 0.0
    %1689 = vmatprep.subr.mxu0 0.0
    %1690 = vmatpush1.msra.mxu0 0.0
    %1691 = vmatprep.subr.mxu0 0.0
    %1692 = vmatpush1.msra.mxu0 0.0
    %1693 = vmatprep.subr.mxu0 0.0
    %1694 = vmatpush1.msra.mxu0 0.0
    %1695 = vmatprep.subr.mxu0 0.0
    %1696 = vmatpush1.msra.mxu0 0.0
    %1697 = vmatprep.subr.mxu0 0.0
    %1698 = vmatpush1.msra.mxu0 0.0
    %1699 = vmatprep.subr.mxu0 0.0
    %1700 = vmatpush1.msra.mxu0 0.0
    %1701 = vmatprep.subr.mxu0 0.0
    %1702 = vmatpush1.msra.mxu0 0.0
    %1703 = vmatprep.subr.mxu0 0.0
    %1704 = vmatpush1.msra.mxu0 0.0
    %1705 = vmatprep.subr.mxu0 0.0
    %1706 = vmatpush1.msra.mxu0 0.0
    %1707 = vmatprep.subr.mxu0 0.0
    %1708 = vmatpush1.msra.mxu0 0.0
    %1709 = vmatprep.subr.mxu0 0.0
    %1710 = vmatpush1.msra.mxu0 0.0
    %1711 = vmatprep.subr.mxu0 0.0
    %1712 = vmatpush1.msra.mxu0 0.0
    %1713 = vmatprep.mubr.f32.mxu0 0.0
    %1714 = vmatmul.mubr.f32.gmra.mrb[0].mxu0 %v1575
    %v1715 = vpop.f32.mrb[0].mxu0
    %v1716 = vadd.f32 0.0, %v1715
    %v1717 = vpop.f32.mrb[0].mxu0
    %v1718 = vadd.f32 0.0, %v1717
    %1719 = vdwg.mxu0
    %v1724 = vcombine.low %v1645, %v1647
    %v1725 = vcombine.low %v1716, %v1718
    %v1727 = vunpack.c.l.s4 1983009808
    %v1728 = vunpack.c.0.s8 %v1727
    %v1729 = vlaneseq
    %v1730 = vshrl.u32 %v1729, 7
    %v1731 = vsub.s32 %v1728, %v1730
    %v1732 = vrot.slane %v1724, %v1731
    %v1734 = vunpack.c.l.s4 1983009808
    %v1735 = vunpack.c.0.s8 %v1734
    %v1736 = vlaneseq
    %v1737 = vshrl.u32 %v1736, 7
    %v1738 = vsub.s32 %v1735, %v1737
    %v1739 = vrot.slane %v1725, %v1738
    %v1740 = vcombine.low %v1732, %v1739
    %v1742 = vadd.f32 %v1577, %v1740
    %v1743 = vmul.f32 %v1742, 0.5
    %v1744 = vtanh.pop %v1743
    %v1745 = vmul.f32 %v1744, 0.5
    %v1746 = vadd.f32 %v1745, 0.5
    %v1748 = vrot.slane %v1742, 4
    %v1750 = vtanh.pop %v1748
    %v1752 = vrot.slane %v1746, 2
    %v1754 = vmul.f32 %v1752, %v1567
    %v1755 = vmul.f32 %v1746, %v1750
    %v1756 = vadd.f32 %v1754, %v1755
    %v1757 = vrot.slane %v1742, 6
    %v1759 = vmul.f32 %v1757, 0.5
    %v1760 = vtanh.pop %v1759
    %v1761 = vmul.f32 %v1760, 0.5
    %v1762 = vadd.f32 %v1761, 0.5
    %v1763 = vtanh.pop %v1756
    %v1764 = vmul.f32 %v1762, %v1763
    %s1765 = scalar_lea.vmem [#allocation2], 56
    %v1766 = vld [vmem:[%s1765] sm:$0xff]
    %1767 = vmatprep.subr.mxu0 %v380
    %1768 = vmatpush1.msra.mxu0 %v379
    %1769 = vmatprep.subr.mxu0 %v384
    %1770 = vmatpush1.msra.mxu0 %v383
    %1771 = vmatprep.subr.mxu0 %v388
    %1772 = vmatpush1.msra.mxu0 %v387
    %1773 = vmatprep.subr.mxu0 %v392
    %1774 = vmatpush1.msra.mxu0 %v391
    %1775 = vmatprep.subr.mxu0 %v396
    %1776 = vmatpush1.msra.mxu0 %v395
    %1777 = vmatprep.subr.mxu0 %v400
    %1778 = vmatpush1.msra.mxu0 %v399
    %1779 = vmatprep.subr.mxu0 %v404
    %1780 = vmatpush1.msra.mxu0 %v403
    %1781 = vmatprep.subr.mxu0 %v408
    %1782 = vmatpush1.msra.mxu0 %v407
    %1783 = vmatprep.subr.mxu0 %v412
    %1784 = vmatpush1.msra.mxu0 %v411
    %1785 = vmatprep.subr.mxu0 %v416
    %1786 = vmatpush1.msra.mxu0 %v415
    %1787 = vmatprep.subr.mxu0 %v420
    %1788 = vmatpush1.msra.mxu0 %v419
    %1789 = vmatprep.subr.mxu0 %v424
    %1790 = vmatpush1.msra.mxu0 %v423
    %1791 = vmatprep.subr.mxu0 %v428
    %1792 = vmatpush1.msra.mxu0 %v427
    %1793 = vmatprep.subr.mxu0 %v432
    %1794 = vmatpush1.msra.mxu0 %v431
    %1795 = vmatprep.subr.mxu0 %v436
    %1796 = vmatpush1.msra.mxu0 %v435
    %1797 = vmatprep.subr.mxu0 %v440
    %1798 = vmatpush1.msra.mxu0 %v439
    %1799 = vmatprep.subr.mxu0 0.0
    %1800 = vmatpush1.msra.mxu0 0.0
    %1801 = vmatprep.subr.mxu0 0.0
    %1802 = vmatpush1.msra.mxu0 0.0
    %1803 = vmatprep.subr.mxu0 0.0
    %1804 = vmatpush1.msra.mxu0 0.0
    %1805 = vmatprep.subr.mxu0 0.0
    %1806 = vmatpush1.msra.mxu0 0.0
    %1807 = vmatprep.subr.mxu0 0.0
    %1808 = vmatpush1.msra.mxu0 0.0
    %1809 = vmatprep.subr.mxu0 0.0
    %1810 = vmatpush1.msra.mxu0 0.0
    %1811 = vmatprep.subr.mxu0 0.0
    %1812 = vmatpush1.msra.mxu0 0.0
    %1813 = vmatprep.subr.mxu0 0.0
    %1814 = vmatpush1.msra.mxu0 0.0
    %1815 = vmatprep.subr.mxu0 0.0
    %1816 = vmatpush1.msra.mxu0 0.0
    %1817 = vmatprep.subr.mxu0 0.0
    %1818 = vmatpush1.msra.mxu0 0.0
    %1819 = vmatprep.subr.mxu0 0.0
    %1820 = vmatpush1.msra.mxu0 0.0
    %1821 = vmatprep.subr.mxu0 0.0
    %1822 = vmatpush1.msra.mxu0 0.0
    %1823 = vmatprep.subr.mxu0 0.0
    %1824 = vmatpush1.msra.mxu0 0.0
    %1825 = vmatprep.subr.mxu0 0.0
    %1826 = vmatpush1.msra.mxu0 0.0
    %1827 = vmatprep.subr.mxu0 0.0
    %1828 = vmatpush1.msra.mxu0 0.0
    %1829 = vmatprep.subr.mxu0 0.0
    %1830 = vmatpush1.msra.mxu0 0.0
    %1831 = vmatprep.mubr.f32.mxu0 0.0
    %1832 = vmatmul.mubr.f32.gmra.mrb[0].mxu0 %v1764
    %v1833 = vpop.f32.mrb[0].mxu0
    %v1834 = vadd.f32 0.0, %v1833
    %v1835 = vpop.f32.mrb[0].mxu0
    %v1836 = vadd.f32 0.0, %v1835
    %1837 = vdwg.mxu0
    %1838 = vmatprep.subr.mxu0 %v382
    %1839 = vmatpush1.msra.mxu0 %v381
    %1840 = vmatprep.subr.mxu0 %v386
    %1841 = vmatpush1.msra.mxu0 %v385
    %1842 = vmatprep.subr.mxu0 %v390
    %1843 = vmatpush1.msra.mxu0 %v389
    %1844 = vmatprep.subr.mxu0 %v394
    %1845 = vmatpush1.msra.mxu0 %v393
    %1846 = vmatprep.subr.mxu0 %v398
    %1847 = vmatpush1.msra.mxu0 %v397
    %1848 = vmatprep.subr.mxu0 %v402
    %1849 = vmatpush1.msra.mxu0 %v401
    %1850 = vmatprep.subr.mxu0 %v406
    %1851 = vmatpush1.msra.mxu0 %v405
    %1852 = vmatprep.subr.mxu0 %v410
    %1853 = vmatpush1.msra.mxu0 %v409
    %1854 = vmatprep.subr.mxu0 %v414
    %1855 = vmatpush1.msra.mxu0 %v413
    %1856 = vmatprep.subr.mxu0 %v418
    %1857 = vmatpush1.msra.mxu0 %v417
    %1858 = vmatprep.subr.mxu0 %v422
    %1859 = vmatpush1.msra.mxu0 %v421
    %1860 = vmatprep.subr.mxu0 %v426
    %1861 = vmatpush1.msra.mxu0 %v425
    %1862 = vmatprep.subr.mxu0 %v430
    %1863 = vmatpush1.msra.mxu0 %v429
    %1864 = vmatprep.subr.mxu0 %v434
    %1865 = vmatpush1.msra.mxu0 %v433
    %1866 = vmatprep.subr.mxu0 %v438
    %1867 = vmatpush1.msra.mxu0 %v437
    %1868 = vmatprep.subr.mxu0 %v442
    %1869 = vmatpush1.msra.mxu0 %v441
    %1870 = vmatprep.subr.mxu0 0.0
    %1871 = vmatpush1.msra.mxu0 0.0
    %1872 = vmatprep.subr.mxu0 0.0
    %1873 = vmatpush1.msra.mxu0 0.0
    %1874 = vmatprep.subr.mxu0 0.0
    %1875 = vmatpush1.msra.mxu0 0.0
    %1876 = vmatprep.subr.mxu0 0.0
    %1877 = vmatpush1.msra.mxu0 0.0
    %1878 = vmatprep.subr.mxu0 0.0
    %1879 = vmatpush1.msra.mxu0 0.0
    %1880 = vmatprep.subr.mxu0 0.0
    %1881 = vmatpush1.msra.mxu0 0.0
    %1882 = vmatprep.subr.mxu0 0.0
    %1883 = vmatpush1.msra.mxu0 0.0
    %1884 = vmatprep.subr.mxu0 0.0
    %1885 = vmatpush1.msra.mxu0 0.0
    %1886 = vmatprep.subr.mxu0 0.0
    %1887 = vmatpush1.msra.mxu0 0.0
    %1888 = vmatprep.subr.mxu0 0.0
    %1889 = vmatpush1.msra.mxu0 0.0
    %1890 = vmatprep.subr.mxu0 0.0
    %1891 = vmatpush1.msra.mxu0 0.0
    %1892 = vmatprep.subr.mxu0 0.0
    %1893 = vmatpush1.msra.mxu0 0.0
    %1894 = vmatprep.subr.mxu0 0.0
    %1895 = vmatpush1.msra.mxu0 0.0
    %1896 = vmatprep.subr.mxu0 0.0
    %1897 = vmatpush1.msra.mxu0 0.0
    %1898 = vmatprep.subr.mxu0 0.0
    %1899 = vmatpush1.msra.mxu0 0.0
    %1900 = vmatprep.subr.mxu0 0.0
    %1901 = vmatpush1.msra.mxu0 0.0
    %1902 = vmatprep.mubr.f32.mxu0 0.0
    %1903 = vmatmul.mubr.f32.gmra.mrb[0].mxu0 %v1764
    %v1904 = vpop.f32.mrb[0].mxu0
    %v1905 = vadd.f32 0.0, %v1904
    %v1906 = vpop.f32.mrb[0].mxu0
    %v1907 = vadd.f32 0.0, %v1906
    %1908 = vdwg.mxu0
    %v1913 = vcombine.low %v1834, %v1836
    %v1914 = vcombine.low %v1905, %v1907
    %v1916 = vunpack.c.l.s4 1983009808
    %v1917 = vunpack.c.0.s8 %v1916
    %v1918 = vlaneseq
    %v1919 = vshrl.u32 %v1918, 7
    %v1920 = vsub.s32 %v1917, %v1919
    %v1921 = vrot.slane %v1913, %v1920
    %v1923 = vunpack.c.l.s4 1983009808
    %v1924 = vunpack.c.0.s8 %v1923
    %v1925 = vlaneseq
    %v1926 = vshrl.u32 %v1925, 7
    %v1927 = vsub.s32 %v1924, %v1926
    %v1928 = vrot.slane %v1914, %v1927
    %v1929 = vcombine.low %v1921, %v1928
    %v1931 = vadd.f32 %v1766, %v1929
    %v1932 = vmul.f32 %v1931, 0.5
    %v1933 = vtanh.pop %v1932
    %v1934 = vmul.f32 %v1933, 0.5
    %v1935 = vadd.f32 %v1934, 0.5
    %v1937 = vrot.slane %v1931, 4
    %v1939 = vtanh.pop %v1937
    %v1941 = vrot.slane %v1935, 2
    %v1943 = vmul.f32 %v1941, %v1756
    %v1944 = vmul.f32 %v1935, %v1939
    %v1945 = vadd.f32 %v1943, %v1944
    %v1946 = vrot.slane %v1931, 6
    %v1948 = vmul.f32 %v1946, 0.5
    %v1949 = vtanh.pop %v1948
    %v1950 = vmul.f32 %v1949, 0.5
    %v1951 = vadd.f32 %v1950, 0.5
    %v1952 = vtanh.pop %v1945
    %v1953 = vmul.f32 %v1951, %v1952
    %v1954 = vld [vmem:[%s4] sm:$0x1]
    %v1956 = vlaneseq
    %v1957 = vshrl.u32 %v1956, 7
    %v1958 = vsub.s32 0, %v1957
    %v1959 = vrot.slane %v1954, %v1958
    %v1961 = vmul.f32 %v1953, %v1959
    %vm1962 = vcmask 1041408
    %v1963 = vsel %vm1962, %v1961, 0.0
    %1964 = vadd.xlane.f32.xlu0 %v1963
    %v1965 = vpop.xlane.xlu0 %1964
    %v1966 = vld [vmem:[#allocation3] sm:$0x1]
    %v1968 = vlaneseq
    %v1969 = vshrl.u32 %v1968, 7
    %v1970 = vsub.s32 0, %v1969
    %v1971 = vrot.slane %v1966, %v1970
    %v1973 = vadd.f32 %v1965, %v1971
    %vm1974 = vcmask 1024
    %1975 = vst.msk [vmem:[%s6] sm:$0x3] %vm1974, %v1973
    // Predicated region
    $region30: #{stock_lstm_forward.1} parent=1 // pred_check
      _
    $region31: #{stock_lstm_forward.1} parent=1 // pred_check_branch
      %1977 = sbr.rel (0) target = $region33
    $region32: #{stock_lstm_forward.1} parent=1 // pred_region
      _
    $region33: #{stock_lstm_forward.1} parent=1 // pred_fallthru
      _
    // Predicated region
    $region34: #{stock_lstm_forward.1} parent=1 // pred_check
      _
    $region35: #{stock_lstm_forward.1} parent=1 // pred_check_branch
      %1979 = sbr.rel (0) target = $region37
    $region36: #{stock_lstm_forward.1} parent=1 // pred_region
      _
    $region37: #{stock_lstm_forward.1} parent=1 // pred_fallthru
      _
    %1980 = vsyncpa [#allocation5], 1

</llo_original>
